<compile_context>
chip_gen: v7x
topology: tpu7x:2x2x1
jax: 0.10.0
libtpu: 0.0.40
codegen_flags: <defaults>
</compile_context>

<pallas_src>
import math

import jax
import jax.numpy as jnp
from jax.experimental import pallas as pl
from jax.experimental.pallas import tpu as pltpu  # noqa: F401  (no TPU-specific params needed here)

# ----------------------------- configuration ------------------------------
B = 2            # batch
L = 8            # sequence length
D = 32           # d_model
H = 4            # heads (d_model divisible by heads)
DH = D // H      # per-head dim
DI = 64          # d_inner
G = H * B        # fused (head, batch) leading axis used inside the kernel
MAX_SEQ = 16     # max_seq for relative embedding E
EPS = 1e-6
PW = 3 * D + H * L   # packed projection width: Q | K | V | Q@E^T  (= 128 here)

assert D % H == 0 and MAX_SEQ >= L and PW <= 128 and DI <= 128

# row indices inside the packed (8, 128) small-parameter slab
_BPJ, _BO, _G1, _BE1, _BF1, _BF2, _G2, _BE2 = range(8)


# ------------------------------ Pallas kernel ------------------------------
def encoder_layer_kernel(
    x_ref,       # (B*L, D)       activations, batch*seq flattened
    wproj_ref,   # (D, PW)        [Wq*s | Wk | Wv | (Wq E^T)*s]  (s = 1/sqrt(dh))
    wow1_ref,    # (D, D+DI)      [Wo | W1]
    w2_ref,      # (DI, D)        FFN_suf weight
    vp_ref,      # (8, 128)       packed vectors: bproj, bo, g1, be1, bf1, bf2, g2, be2
    out_ref,     # (B*L, D)
):
    x2 = x_ref[...]                                   # (B*L, D)
    vp = vp_ref[...]                                  # (8, 128)

    # ---- fused Q / K / V / (Q@E^T) projection: one lane-dense MXU matmul ----
    proj = jnp.dot(x2, wproj_ref[...], preferred_element_type=jnp.float32)
    proj = proj + vp[_BPJ:_BPJ + 1, 0:PW]             # (B*L, PW)

    # split heads -> fused (head, batch) leading axis g = h*B + b (layout-only ops)
    def split_heads(t2):                              # (B*L, H*DH) -> (G, L, DH)
        return jnp.concatenate(
            [t2[:, h * DH:(h + 1) * DH].reshape(B, L, DH) for h in range(H)], axis=0)

    q = split_heads(proj[:, 0:D])                     # 1/sqrt(dh) already folded in
    k = split_heads(proj[:, D:2 * D])
    v = split_heads(proj[:, 2 * D:3 * D])
    qe = jnp.concatenate(                             # (G, L, L): qe[g,i,m] = <q_gi, E[m]>
        [proj[:, 3 * D + h * L:3 * D + (h + 1) * L].reshape(B, L, L) for h in range(H)],
        axis=0)

    # ---- relative-position skew: Srel[g,i,j] = qe[g,i, L-1-i+j] * (j <= i) ----
    # the zero lane-padding on the right doubles as the lower-triangular mask.
    # TODO(synk): at production L replace this unrolled shift with a strided pltpu.roll and
    # flash-style KV tiling (q axis "parallel" for v7x's 2 TCs; tiles ~half the v6e size).
    qe_pad = jnp.concatenate([qe, jnp.zeros((G, L, L - 1), jnp.float32)], axis=-1)
    row_i = jax.lax.broadcasted_iota(jnp.int32, (G, L, L), 1)
    srel = jnp.zeros((G, L, L), jnp.float32)
    for i in range(L):                                # compile-time unrolled (L = 8)
        s = L - 1 - i
        srel = srel + jnp.where(row_i == i, qe_pad[:, :, s:s + L], 0.0)

    # ---- attention, batched over the fused (head, batch) axis ----
    qkt = jnp.einsum("gid,gjd->gij", q, k, preferred_element_type=jnp.float32)
    logits = qkt + srel                               # already scaled by 1/sqrt(dh)
    mx = jnp.max(logits, axis=-1, keepdims=True)
    p = jnp.exp(logits - mx)
    attn_w = p / jnp.sum(p, axis=-1, keepdims=True)   # exact softmax normalization
    ctx = jnp.einsum("gij,gjd->gid", attn_w, v, preferred_element_type=jnp.float32)

    # ---- head concat (lane concat) fused into ONE dense output projection ----
    ctx_flat = jnp.concatenate(
        [ctx[h * B:(h + 1) * B].reshape(B * L, DH) for h in range(H)], axis=-1)  # (B*L, D)
    wow1 = wow1_ref[...]
    attn_out = jnp.dot(ctx_flat, wow1[:, 0:D],
                       preferred_element_type=jnp.float32) + vp[_BO:_BO + 1, 0:D]

    # ---- residual + LN1 + FFN + residual + LN2 ----
    def layernorm(z, g, b):
        mu = jnp.mean(z, axis=-1, keepdims=True)
        var = jnp.mean((z - mu) ** 2, axis=-1, keepdims=True)
        return (z - mu) * jax.lax.rsqrt(var + EPS) * g + b

    # TODO(synk): dropout1/dropout2 are identity (inference); no RNG applied.
    out1 = layernorm(attn_out + x2, vp[_G1:_G1 + 1, 0:D], vp[_BE1:_BE1 + 1, 0:D])

    h1 = jnp.dot(out1, wow1[:, D:D + DI], preferred_element_type=jnp.float32)
    h1 = jnp.maximum(h1 + vp[_BF1:_BF1 + 1, 0:DI], 0.0)        # ReLU(FFN_pre)
    h2 = jnp.dot(h1, w2_ref[...], preferred_element_type=jnp.float32)
    h2 = h2 + vp[_BF2:_BF2 + 1, 0:D]                            # FFN_suf

    out_ref[...] = layernorm(out1 + h2, vp[_G2:_G2 + 1, 0:D], vp[_BE2:_BE2 + 1, 0:D])


# ------------------------- one-time parameter packing -----------------------
def pack_params(params):
    """One-time parameter re-layout / folding (pure plumbing; call once at init)."""
    scale = 1.0 / math.sqrt(DH)
    e_slice = params["E"][MAX_SEQ - L:, :]                                   # (L, DH)
    wq, wk, wv = params["wq"], params["wk"], params["wv"]
    bq, bk, bv = params["bq"][0], params["bk"][0], params["bv"][0]

    # fold the relative embedding into the q projection per head:
    #   (x Wq_h + bq_h) E^T == x (Wq_h E^T) + bq_h E^T
    we = jnp.concatenate(
        [wq[:, h * DH:(h + 1) * DH] @ e_slice.T for h in range(H)], axis=1)  # (D, H*L)
    bqe = jnp.concatenate(
        [bq[h * DH:(h + 1) * DH] @ e_slice.T for h in range(H)], axis=0)     # (H*L,)

    wproj = jnp.concatenate([wq * scale, wk, wv, we * scale], axis=1)        # (D, PW)
    bproj = jnp.concatenate([bq * scale, bk, bv, bqe * scale], axis=0)       # (PW,)

    wow1 = jnp.concatenate([params["wo"], params["w1"]], axis=1)             # (D, D+DI)

    vp = jnp.zeros((8, 128), jnp.float32)
    vp = vp.at[_BPJ, :PW].set(bproj)
    vp = vp.at[_BO, :D].set(params["bo"][0])
    vp = vp.at[_G1, :D].set(params["g1"][0])
    vp = vp.at[_BE1, :D].set(params["be1"][0])
    vp = vp.at[_BF1, :DI].set(params["bf1"][0])
    vp = vp.at[_BF2, :D].set(params["bf2"][0])
    vp = vp.at[_G2, :D].set(params["g2"][0])
    vp = vp.at[_BE2, :D].set(params["be2"][0])

    return {"wproj": wproj, "wow1": wow1, "w2": params["w2"], "vp": vp}


# ------------------------------ wrapper ------------------------------------
def encoder_layer(x, packed):
    """x: (B, L, D) float32; packed: output of pack_params(). Returns (B, L, D)."""
    assert x.shape == (B, L, D)
    x_flat = x.reshape(B * L, D)
    # Single grid-less invocation: all operands are tiny and fully VMEM-resident.
    # TODO(synk): when stacking N encoder layers, switch to grid=(N,) with weights indexed
    # by program_id and keep activations in a lane-padded (B*L, 128) slab across layers.
    out = pl.pallas_call(
        encoder_layer_kernel,
        out_shape=jax.ShapeDtypeStruct((B * L, D), jnp.float32),
    )(x_flat, packed["wproj"], packed["wow1"], packed["w2"], packed["vp"])
    return out.reshape(B, L, D)


# -------------------------- pure-JAX reference ------------------------------
def reference_forward(x, params):
    """Mirrors the PyTorch forward exactly (incl. pad/reshape skew)."""
    Bsz, Lq, Dm = x.shape
    lin = lambda z, w, b: z @ w + b[0]

    q = lin(x, params["wq"], params["bq"]).reshape(Bsz, Lq, H, DH).transpose(0, 2, 1, 3)
    k = lin(x, params["wk"], params["bk"]).reshape(Bsz, Lq, H, DH).transpose(0, 2, 1, 3)
    v = lin(x, params["wv"], params["bv"]).reshape(Bsz, Lq, H, DH).transpose(0, 2, 1, 3)

    e = params["E"][MAX_SEQ - Lq:, :]                        # (L, DH)
    qe = jnp.einsum("bhld,md->bhlm", q, e)
    lens = jnp.arange(Lq - 1, -1, -1)                        # _qe_masking
    keep = ~(jnp.arange(Lq)[None, :] < lens[:, None])
    qe = qe * keep.astype(qe.dtype)
    padded = jnp.pad(qe, ((0, 0), (0, 0), (0, 0), (1, 0)))   # _skewing
    srel = padded.reshape(Bsz, H, Lq + 1, Lq)[:, :, 1:, :]

    logits = (jnp.einsum("bhld,bhmd->bhlm", q, k) + srel) / math.sqrt(DH)
    w = jax.nn.softmax(logits, axis=-1)
    attn = jnp.einsum("bhlm,bhmd->bhld", w, v).transpose(0, 2, 1, 3).reshape(Bsz, Lq, Dm)
    attn = lin(attn, params["wo"], params["bo"])

    def ln(z, g, b):
        mu = jnp.mean(z, axis=-1, keepdims=True)
        var = jnp.mean((z - mu) ** 2, axis=-1, keepdims=True)
        return (z - mu) / jnp.sqrt(var + EPS) * g[0] + b[0]

    out1 = ln(attn + x, params["g1"], params["be1"])
    ffn = jax.nn.relu(lin(out1, params["w1"], params["bf1"]))
    ffn = lin(ffn, params["w2"], params["bf2"])
    return ln(out1 + ffn, params["g2"], params["be2"])


# --------------------------------- main --------------------------------------
def make_params(key):
    ks = jax.random.split(key, 12)
    n = lambda k, shp, s=0.1: (s * jax.random.normal(k, shp)).astype(jnp.float32)
    return {
        "wq": n(ks[0], (D, D)), "bq": n(ks[1], (1, D), 0.02),
        "wk": n(ks[2], (D, D)), "bk": n(ks[3], (1, D), 0.02),
        "wv": n(ks[4], (D, D)), "bv": n(ks[5], (1, D), 0.02),
        "wo": n(ks[6], (D, D)), "bo": n(ks[7], (1, D), 0.02),
        "E":  n(ks[8], (MAX_SEQ, DH), 0.1),
        "w1": n(ks[9], (D, DI)), "bf1": n(ks[10], (1, DI), 0.02),
        "w2": n(ks[11], (DI, D)), "bf2": jnp.zeros((1, D), jnp.float32),
        "g1": jnp.ones((1, D), jnp.float32), "be1": jnp.zeros((1, D), jnp.float32),
        "g2": jnp.ones((1, D), jnp.float32), "be2": jnp.zeros((1, D), jnp.float32),
    }


if __name__ == "__main__":
    key = jax.random.PRNGKey(0)
    kx, kp = jax.random.split(key)
    x = jax.random.normal(kx, (B, L, D), dtype=jnp.float32)
    params = make_params(kp)

    packed = pack_params(params)      # init-time packing, outside the per-call path

    out = encoder_layer(x, packed)
    out = jax.block_until_ready(out)

    ref = reference_forward(x, params)
    assert out.shape == (B, L, D)
    err = jnp.max(jnp.abs(out - ref))
    assert jnp.allclose(out, ref, atol=1e-3, rtol=1e-3), f"max abs err {err}"
    print("KERNEL_OK")
</pallas_src>

<mosaic_0001>
module attributes {stable_mosaic.version = 11 : i64} {
  func.func @encoder_layer_kernel(%arg0: memref<16x32xf32, #tpu.memory_space<vmem>>, %arg1: memref<32x128xf32, #tpu.memory_space<vmem>>, %arg2: memref<32x96xf32, #tpu.memory_space<vmem>>, %arg3: memref<64x32xf32, #tpu.memory_space<vmem>>, %arg4: memref<8x128xf32, #tpu.memory_space<vmem>>, %arg5: memref<16x32xf32, #tpu.memory_space<vmem>>) attributes {dimension_semantics = [], scalar_prefetch = 0 : i64, scratch_operands = 0 : i64, tpu.core_type = #tpu.core_type<tc>} {
    %c0 = arith.constant 0 : index
    %c0_0 = arith.constant 0 : index
    %0 = vector.load %arg0[%c0, %c0_0] : memref<16x32xf32, #tpu.memory_space<vmem>>, vector<16x32xf32>
    %c0_1 = arith.constant 0 : index
    %c0_2 = arith.constant 0 : index
    %1 = vector.load %arg4[%c0_1, %c0_2] : memref<8x128xf32, #tpu.memory_space<vmem>>, vector<8x128xf32>
    %c0_3 = arith.constant 0 : index
    %c0_4 = arith.constant 0 : index
    %2 = vector.load %arg1[%c0_3, %c0_4] : memref<32x128xf32, #tpu.memory_space<vmem>>, vector<32x128xf32>
    %cst = arith.constant dense<0.000000e+00> : vector<16x128xf32>
    %3 = tpu.matmul %0, %2, %cst {dimension_numbers = #tpu.dot_dimension_numbers<[1], [0], [0], [1], [0, 0, 1, 1], [], []>} : vector<16x32xf32>, vector<32x128xf32>, vector<16x128xf32> -> vector<16x128xf32>
    %4 = vector.extract_strided_slice %1 {offsets = [0, 0], sizes = [1, 128], strides = [1, 1]} : vector<8x128xf32> to vector<1x128xf32>
    %5 = vector.broadcast %4 : vector<1x128xf32> to vector<16x128xf32>
    %6 = arith.addf %3, %5 : vector<16x128xf32>
    %7 = vector.extract_strided_slice %6 {offsets = [0, 0], sizes = [16, 32], strides = [1, 1]} : vector<16x128xf32> to vector<16x32xf32>
    %8 = vector.extract_strided_slice %7 {offsets = [0, 0], sizes = [16, 8], strides = [1, 1]} : vector<16x32xf32> to vector<16x8xf32>
    %9 = vector.shape_cast %8 : vector<16x8xf32> to vector<2x8x8xf32>
    %10 = vector.extract_strided_slice %7 {offsets = [0, 8], sizes = [16, 8], strides = [1, 1]} : vector<16x32xf32> to vector<16x8xf32>
    %11 = vector.shape_cast %10 : vector<16x8xf32> to vector<2x8x8xf32>
    %12 = vector.extract_strided_slice %7 {offsets = [0, 16], sizes = [16, 8], strides = [1, 1]} : vector<16x32xf32> to vector<16x8xf32>
    %13 = vector.shape_cast %12 : vector<16x8xf32> to vector<2x8x8xf32>
    %14 = vector.extract_strided_slice %7 {offsets = [0, 24], sizes = [16, 8], strides = [1, 1]} : vector<16x32xf32> to vector<16x8xf32>
    %15 = vector.shape_cast %14 : vector<16x8xf32> to vector<2x8x8xf32>
    %16 = tpu.concatenate %9, %11, %13, %15 in 0 : vector<2x8x8xf32>, vector<2x8x8xf32>, vector<2x8x8xf32>, vector<2x8x8xf32> -> vector<8x8x8xf32>
    %17 = vector.extract_strided_slice %6 {offsets = [0, 32], sizes = [16, 32], strides = [1, 1]} : vector<16x128xf32> to vector<16x32xf32>
    %18 = vector.extract_strided_slice %17 {offsets = [0, 0], sizes = [16, 8], strides = [1, 1]} : vector<16x32xf32> to vector<16x8xf32>
    %19 = vector.shape_cast %18 : vector<16x8xf32> to vector<2x8x8xf32>
    %20 = vector.extract_strided_slice %17 {offsets = [0, 8], sizes = [16, 8], strides = [1, 1]} : vector<16x32xf32> to vector<16x8xf32>
    %21 = vector.shape_cast %20 : vector<16x8xf32> to vector<2x8x8xf32>
    %22 = vector.extract_strided_slice %17 {offsets = [0, 16], sizes = [16, 8], strides = [1, 1]} : vector<16x32xf32> to vector<16x8xf32>
    %23 = vector.shape_cast %22 : vector<16x8xf32> to vector<2x8x8xf32>
    %24 = vector.extract_strided_slice %17 {offsets = [0, 24], sizes = [16, 8], strides = [1, 1]} : vector<16x32xf32> to vector<16x8xf32>
    %25 = vector.shape_cast %24 : vector<16x8xf32> to vector<2x8x8xf32>
    %26 = tpu.concatenate %19, %21, %23, %25 in 0 : vector<2x8x8xf32>, vector<2x8x8xf32>, vector<2x8x8xf32>, vector<2x8x8xf32> -> vector<8x8x8xf32>
    %27 = vector.extract_strided_slice %6 {offsets = [0, 64], sizes = [16, 32], strides = [1, 1]} : vector<16x128xf32> to vector<16x32xf32>
    %28 = vector.extract_strided_slice %27 {offsets = [0, 0], sizes = [16, 8], strides = [1, 1]} : vector<16x32xf32> to vector<16x8xf32>
    %29 = vector.shape_cast %28 : vector<16x8xf32> to vector<2x8x8xf32>
    %30 = vector.extract_strided_slice %27 {offsets = [0, 8], sizes = [16, 8], strides = [1, 1]} : vector<16x32xf32> to vector<16x8xf32>
    %31 = vector.shape_cast %30 : vector<16x8xf32> to vector<2x8x8xf32>
    %32 = vector.extract_strided_slice %27 {offsets = [0, 16], sizes = [16, 8], strides = [1, 1]} : vector<16x32xf32> to vector<16x8xf32>
    %33 = vector.shape_cast %32 : vector<16x8xf32> to vector<2x8x8xf32>
    %34 = vector.extract_strided_slice %27 {offsets = [0, 24], sizes = [16, 8], strides = [1, 1]} : vector<16x32xf32> to vector<16x8xf32>
    %35 = vector.shape_cast %34 : vector<16x8xf32> to vector<2x8x8xf32>
    %36 = tpu.concatenate %29, %31, %33, %35 in 0 : vector<2x8x8xf32>, vector<2x8x8xf32>, vector<2x8x8xf32>, vector<2x8x8xf32> -> vector<8x8x8xf32>
    %37 = vector.extract_strided_slice %6 {offsets = [0, 96], sizes = [16, 8], strides = [1, 1]} : vector<16x128xf32> to vector<16x8xf32>
    %38 = vector.shape_cast %37 : vector<16x8xf32> to vector<2x8x8xf32>
    %39 = vector.extract_strided_slice %6 {offsets = [0, 104], sizes = [16, 8], strides = [1, 1]} : vector<16x128xf32> to vector<16x8xf32>
    %40 = vector.shape_cast %39 : vector<16x8xf32> to vector<2x8x8xf32>
    %41 = vector.extract_strided_slice %6 {offsets = [0, 112], sizes = [16, 8], strides = [1, 1]} : vector<16x128xf32> to vector<16x8xf32>
    %42 = vector.shape_cast %41 : vector<16x8xf32> to vector<2x8x8xf32>
    %43 = vector.extract_strided_slice %6 {offsets = [0, 120], sizes = [16, 8], strides = [1, 1]} : vector<16x128xf32> to vector<16x8xf32>
    %44 = vector.shape_cast %43 : vector<16x8xf32> to vector<2x8x8xf32>
    %45 = tpu.concatenate %38, %40, %42, %44 in 0 : vector<2x8x8xf32>, vector<2x8x8xf32>, vector<2x8x8xf32>, vector<2x8x8xf32> -> vector<8x8x8xf32>
    %cst_5 = arith.constant 0.000000e+00 : f32
    %46 = vector.broadcast %cst_5 : f32 to vector<8x8x7xf32>
    %47 = tpu.concatenate %45, %46 in 2 : vector<8x8x8xf32>, vector<8x8x7xf32> -> vector<8x8x15xf32>
    %48 = tpu.iota {dimensions = array<i32: 1>} : vector<8x8x8xi32>
    %cst_6 = arith.constant 0.000000e+00 : f32
    %49 = vector.broadcast %cst_6 : f32 to vector<8x8x8xf32>
    %c0_i32 = arith.constant 0 : i32
    %50 = vector.broadcast %c0_i32 : i32 to vector<8x8x8xi32>
    %51 = arith.cmpi eq, %48, %50 : vector<8x8x8xi32>
    %52 = vector.extract_strided_slice %47 {offsets = [0, 0, 7], sizes = [8, 8, 8], strides = [1, 1, 1]} : vector<8x8x15xf32> to vector<8x8x8xf32>
    %cst_7 = arith.constant 0.000000e+00 : f32
    %53 = vector.broadcast %cst_7 : f32 to vector<8x8x8xf32>
    %54 = arith.select %51, %52, %53 : vector<8x8x8xi1>, vector<8x8x8xf32>
    %55 = arith.addf %49, %54 : vector<8x8x8xf32>
    %c1_i32 = arith.constant 1 : i32
    %56 = vector.broadcast %c1_i32 : i32 to vector<8x8x8xi32>
    %57 = arith.cmpi eq, %48, %56 : vector<8x8x8xi32>
    %58 = vector.extract_strided_slice %47 {offsets = [0, 0, 6], sizes = [8, 8, 8], strides = [1, 1, 1]} : vector<8x8x15xf32> to vector<8x8x8xf32>
    %cst_8 = arith.constant 0.000000e+00 : f32
    %59 = vector.broadcast %cst_8 : f32 to vector<8x8x8xf32>
    %60 = arith.select %57, %58, %59 : vector<8x8x8xi1>, vector<8x8x8xf32>
    %61 = arith.addf %55, %60 : vector<8x8x8xf32>
    %c2_i32 = arith.constant 2 : i32
    %62 = vector.broadcast %c2_i32 : i32 to vector<8x8x8xi32>
    %63 = arith.cmpi eq, %48, %62 : vector<8x8x8xi32>
    %64 = vector.extract_strided_slice %47 {offsets = [0, 0, 5], sizes = [8, 8, 8], strides = [1, 1, 1]} : vector<8x8x15xf32> to vector<8x8x8xf32>
    %cst_9 = arith.constant 0.000000e+00 : f32
    %65 = vector.broadcast %cst_9 : f32 to vector<8x8x8xf32>
    %66 = arith.select %63, %64, %65 : vector<8x8x8xi1>, vector<8x8x8xf32>
    %67 = arith.addf %61, %66 : vector<8x8x8xf32>
    %c3_i32 = arith.constant 3 : i32
    %68 = vector.broadcast %c3_i32 : i32 to vector<8x8x8xi32>
    %69 = arith.cmpi eq, %48, %68 : vector<8x8x8xi32>
    %70 = vector.extract_strided_slice %47 {offsets = [0, 0, 4], sizes = [8, 8, 8], strides = [1, 1, 1]} : vector<8x8x15xf32> to vector<8x8x8xf32>
    %cst_10 = arith.constant 0.000000e+00 : f32
    %71 = vector.broadcast %cst_10 : f32 to vector<8x8x8xf32>
    %72 = arith.select %69, %70, %71 : vector<8x8x8xi1>, vector<8x8x8xf32>
    %73 = arith.addf %67, %72 : vector<8x8x8xf32>
    %c4_i32 = arith.constant 4 : i32
    %74 = vector.broadcast %c4_i32 : i32 to vector<8x8x8xi32>
    %75 = arith.cmpi eq, %48, %74 : vector<8x8x8xi32>
    %76 = vector.extract_strided_slice %47 {offsets = [0, 0, 3], sizes = [8, 8, 8], strides = [1, 1, 1]} : vector<8x8x15xf32> to vector<8x8x8xf32>
    %cst_11 = arith.constant 0.000000e+00 : f32
    %77 = vector.broadcast %cst_11 : f32 to vector<8x8x8xf32>
    %78 = arith.select %75, %76, %77 : vector<8x8x8xi1>, vector<8x8x8xf32>
    %79 = arith.addf %73, %78 : vector<8x8x8xf32>
    %c5_i32 = arith.constant 5 : i32
    %80 = vector.broadcast %c5_i32 : i32 to vector<8x8x8xi32>
    %81 = arith.cmpi eq, %48, %80 : vector<8x8x8xi32>
    %82 = vector.extract_strided_slice %47 {offsets = [0, 0, 2], sizes = [8, 8, 8], strides = [1, 1, 1]} : vector<8x8x15xf32> to vector<8x8x8xf32>
    %cst_12 = arith.constant 0.000000e+00 : f32
    %83 = vector.broadcast %cst_12 : f32 to vector<8x8x8xf32>
    %84 = arith.select %81, %82, %83 : vector<8x8x8xi1>, vector<8x8x8xf32>
    %85 = arith.addf %79, %84 : vector<8x8x8xf32>
    %c6_i32 = arith.constant 6 : i32
    %86 = vector.broadcast %c6_i32 : i32 to vector<8x8x8xi32>
    %87 = arith.cmpi eq, %48, %86 : vector<8x8x8xi32>
    %88 = vector.extract_strided_slice %47 {offsets = [0, 0, 1], sizes = [8, 8, 8], strides = [1, 1, 1]} : vector<8x8x15xf32> to vector<8x8x8xf32>
    %cst_13 = arith.constant 0.000000e+00 : f32
    %89 = vector.broadcast %cst_13 : f32 to vector<8x8x8xf32>
    %90 = arith.select %87, %88, %89 : vector<8x8x8xi1>, vector<8x8x8xf32>
    %91 = arith.addf %85, %90 : vector<8x8x8xf32>
    %c7_i32 = arith.constant 7 : i32
    %92 = vector.broadcast %c7_i32 : i32 to vector<8x8x8xi32>
    %93 = arith.cmpi eq, %48, %92 : vector<8x8x8xi32>
    %94 = vector.extract_strided_slice %47 {offsets = [0, 0, 0], sizes = [8, 8, 8], strides = [1, 1, 1]} : vector<8x8x15xf32> to vector<8x8x8xf32>
    %cst_14 = arith.constant 0.000000e+00 : f32
    %95 = vector.broadcast %cst_14 : f32 to vector<8x8x8xf32>
    %96 = arith.select %93, %94, %95 : vector<8x8x8xi1>, vector<8x8x8xf32>
    %97 = arith.addf %91, %96 : vector<8x8x8xf32>
    "tpu.trace_start"() <{level = 10 : i32, message = "gid,gjd->gij"}> : () -> ()
    %cst_15 = arith.constant dense<0.000000e+00> : vector<8x8x8xf32>
    %98 = tpu.matmul %16, %26, %cst_15 {dimension_numbers = #tpu.dot_dimension_numbers<[2], [2], [1], [1], [0, 0, 0, 1, 1, 1], [0], [0]>} : vector<8x8x8xf32>, vector<8x8x8xf32>, vector<8x8x8xf32> -> vector<8x8x8xf32>
    "tpu.trace_stop"() : () -> ()
    %99 = arith.addf %98, %97 : vector<8x8x8xf32>
    %cst_16 = arith.constant dense<0xFF800000> : vector<8x8xf32>
    %100 = vector.multi_reduction <maximumf>, %99, %cst_16 [2] : vector<8x8x8xf32> to vector<8x8xf32>
    %101 = vector.shape_cast %100 : vector<8x8xf32> to vector<8x8x1xf32>
    %102 = vector.broadcast %101 : vector<8x8x1xf32> to vector<8x8x8xf32>
    %103 = arith.subf %99, %102 : vector<8x8x8xf32>
    %104 = math.exp %103 : vector<8x8x8xf32>
    %cst_17 = arith.constant dense<0.000000e+00> : vector<8x8xf32>
    %105 = vector.multi_reduction <add>, %104, %cst_17 [2] : vector<8x8x8xf32> to vector<8x8xf32>
    %106 = vector.shape_cast %105 : vector<8x8xf32> to vector<8x8x1xf32>
    %107 = vector.broadcast %106 : vector<8x8x1xf32> to vector<8x8x8xf32>
    %108 = arith.divf %104, %107 : vector<8x8x8xf32>
    "tpu.trace_start"() <{level = 10 : i32, message = "gij,gjd->gid"}> : () -> ()
    %cst_18 = arith.constant dense<0.000000e+00> : vector<8x8x8xf32>
    %109 = tpu.matmul %108, %36, %cst_18 {dimension_numbers = #tpu.dot_dimension_numbers<[2], [1], [1], [2], [0, 0, 0, 1, 1, 2], [0], [0]>} : vector<8x8x8xf32>, vector<8x8x8xf32>, vector<8x8x8xf32> -> vector<8x8x8xf32>
    "tpu.trace_stop"() : () -> ()
    %110 = vector.extract_strided_slice %109 {offsets = [0, 0, 0], sizes = [2, 8, 8], strides = [1, 1, 1]} : vector<8x8x8xf32> to vector<2x8x8xf32>
    %111 = vector.shape_cast %110 : vector<2x8x8xf32> to vector<16x8xf32>
    %112 = vector.extract_strided_slice %109 {offsets = [2, 0, 0], sizes = [2, 8, 8], strides = [1, 1, 1]} : vector<8x8x8xf32> to vector<2x8x8xf32>
    %113 = vector.shape_cast %112 : vector<2x8x8xf32> to vector<16x8xf32>
    %114 = vector.extract_strided_slice %109 {offsets = [4, 0, 0], sizes = [2, 8, 8], strides = [1, 1, 1]} : vector<8x8x8xf32> to vector<2x8x8xf32>
    %115 = vector.shape_cast %114 : vector<2x8x8xf32> to vector<16x8xf32>
    %116 = vector.extract_strided_slice %109 {offsets = [6, 0, 0], sizes = [2, 8, 8], strides = [1, 1, 1]} : vector<8x8x8xf32> to vector<2x8x8xf32>
    %117 = vector.shape_cast %116 : vector<2x8x8xf32> to vector<16x8xf32>
    %118 = tpu.concatenate %111, %113, %115, %117 in 1 : vector<16x8xf32>, vector<16x8xf32>, vector<16x8xf32>, vector<16x8xf32> -> vector<16x32xf32>
    %c0_19 = arith.constant 0 : index
    %c0_20 = arith.constant 0 : index
    %119 = vector.load %arg2[%c0_19, %c0_20] : memref<32x96xf32, #tpu.memory_space<vmem>>, vector<32x96xf32>
    %120 = vector.extract_strided_slice %119 {offsets = [0, 0], sizes = [32, 32], strides = [1, 1]} : vector<32x96xf32> to vector<32x32xf32>
    %cst_21 = arith.constant dense<0.000000e+00> : vector<16x32xf32>
    %121 = tpu.matmul %118, %120, %cst_21 {dimension_numbers = #tpu.dot_dimension_numbers<[1], [0], [0], [1], [0, 0, 1, 1], [], []>} : vector<16x32xf32>, vector<32x32xf32>, vector<16x32xf32> -> vector<16x32xf32>
    %122 = vector.extract_strided_slice %1 {offsets = [1, 0], sizes = [1, 32], strides = [1, 1]} : vector<8x128xf32> to vector<1x32xf32>
    %123 = vector.broadcast %122 : vector<1x32xf32> to vector<16x32xf32>
    %124 = arith.addf %121, %123 : vector<16x32xf32>
    %125 = arith.addf %124, %0 : vector<16x32xf32>
    %126 = vector.extract_strided_slice %1 {offsets = [2, 0], sizes = [1, 32], strides = [1, 1]} : vector<8x128xf32> to vector<1x32xf32>
    %127 = vector.extract_strided_slice %1 {offsets = [3, 0], sizes = [1, 32], strides = [1, 1]} : vector<8x128xf32> to vector<1x32xf32>
    %cst_22 = arith.constant dense<0.000000e+00> : vector<16xf32>
    %128 = vector.multi_reduction <add>, %125, %cst_22 [1] : vector<16x32xf32> to vector<16xf32>
    %129 = vector.shape_cast %128 : vector<16xf32> to vector<16x1xf32>
    %cst_23 = arith.constant 3.200000e+01 : f32
    %130 = vector.broadcast %cst_23 : f32 to vector<16x1xf32>
    %131 = arith.divf %129, %130 : vector<16x1xf32>
    %132 = vector.broadcast %131 : vector<16x1xf32> to vector<16x32xf32>
    %133 = arith.subf %125, %132 : vector<16x32xf32>
    %134 = arith.mulf %133, %133 : vector<16x32xf32>
    %cst_24 = arith.constant dense<0.000000e+00> : vector<16xf32>
    %135 = vector.multi_reduction <add>, %134, %cst_24 [1] : vector<16x32xf32> to vector<16xf32>
    %136 = vector.shape_cast %135 : vector<16xf32> to vector<16x1xf32>
    %cst_25 = arith.constant 3.200000e+01 : f32
    %137 = vector.broadcast %cst_25 : f32 to vector<16x1xf32>
    %138 = arith.divf %136, %137 : vector<16x1xf32>
    %139 = vector.broadcast %131 : vector<16x1xf32> to vector<16x32xf32>
    %140 = arith.subf %125, %139 : vector<16x32xf32>
    %cst_26 = arith.constant 9.99999997E-7 : f32
    %141 = vector.broadcast %cst_26 : f32 to vector<16x1xf32>
    %142 = arith.addf %138, %141 : vector<16x1xf32>
    %143 = math.rsqrt %142 : vector<16x1xf32>
    %144 = vector.broadcast %143 : vector<16x1xf32> to vector<16x32xf32>
    %145 = arith.mulf %140, %144 : vector<16x32xf32>
    %146 = vector.broadcast %126 : vector<1x32xf32> to vector<16x32xf32>
    %147 = arith.mulf %145, %146 : vector<16x32xf32>
    %148 = vector.broadcast %127 : vector<1x32xf32> to vector<16x32xf32>
    %149 = arith.addf %147, %148 : vector<16x32xf32>
    %150 = vector.extract_strided_slice %119 {offsets = [0, 32], sizes = [32, 64], strides = [1, 1]} : vector<32x96xf32> to vector<32x64xf32>
    %cst_27 = arith.constant dense<0.000000e+00> : vector<16x64xf32>
    %151 = tpu.matmul %149, %150, %cst_27 {dimension_numbers = #tpu.dot_dimension_numbers<[1], [0], [0], [1], [0, 0, 1, 1], [], []>} : vector<16x32xf32>, vector<32x64xf32>, vector<16x64xf32> -> vector<16x64xf32>
    %152 = vector.extract_strided_slice %1 {offsets = [4, 0], sizes = [1, 64], strides = [1, 1]} : vector<8x128xf32> to vector<1x64xf32>
    %153 = vector.broadcast %152 : vector<1x64xf32> to vector<16x64xf32>
    %154 = arith.addf %151, %153 : vector<16x64xf32>
    %cst_28 = arith.constant 0.000000e+00 : f32
    %155 = vector.broadcast %cst_28 : f32 to vector<16x64xf32>
    %156 = arith.maximumf %154, %155 : vector<16x64xf32>
    %c0_29 = arith.constant 0 : index
    %c0_30 = arith.constant 0 : index
    %157 = vector.load %arg3[%c0_29, %c0_30] : memref<64x32xf32, #tpu.memory_space<vmem>>, vector<64x32xf32>
    %cst_31 = arith.constant dense<0.000000e+00> : vector<16x32xf32>
    %158 = tpu.matmul %156, %157, %cst_31 {dimension_numbers = #tpu.dot_dimension_numbers<[1], [0], [0], [1], [0, 0, 1, 1], [], []>} : vector<16x64xf32>, vector<64x32xf32>, vector<16x32xf32> -> vector<16x32xf32>
    %159 = vector.extract_strided_slice %1 {offsets = [5, 0], sizes = [1, 32], strides = [1, 1]} : vector<8x128xf32> to vector<1x32xf32>
    %160 = vector.broadcast %159 : vector<1x32xf32> to vector<16x32xf32>
    %161 = arith.addf %158, %160 : vector<16x32xf32>
    %162 = arith.addf %149, %161 : vector<16x32xf32>
    %163 = vector.extract_strided_slice %1 {offsets = [6, 0], sizes = [1, 32], strides = [1, 1]} : vector<8x128xf32> to vector<1x32xf32>
    %164 = vector.extract_strided_slice %1 {offsets = [7, 0], sizes = [1, 32], strides = [1, 1]} : vector<8x128xf32> to vector<1x32xf32>
    %cst_32 = arith.constant dense<0.000000e+00> : vector<16xf32>
    %165 = vector.multi_reduction <add>, %162, %cst_32 [1] : vector<16x32xf32> to vector<16xf32>
    %166 = vector.shape_cast %165 : vector<16xf32> to vector<16x1xf32>
    %cst_33 = arith.constant 3.200000e+01 : f32
    %167 = vector.broadcast %cst_33 : f32 to vector<16x1xf32>
    %168 = arith.divf %166, %167 : vector<16x1xf32>
    %169 = vector.broadcast %168 : vector<16x1xf32> to vector<16x32xf32>
    %170 = arith.subf %162, %169 : vector<16x32xf32>
    %171 = arith.mulf %170, %170 : vector<16x32xf32>
    %cst_34 = arith.constant dense<0.000000e+00> : vector<16xf32>
    %172 = vector.multi_reduction <add>, %171, %cst_34 [1] : vector<16x32xf32> to vector<16xf32>
    %173 = vector.shape_cast %172 : vector<16xf32> to vector<16x1xf32>
    %cst_35 = arith.constant 3.200000e+01 : f32
    %174 = vector.broadcast %cst_35 : f32 to vector<16x1xf32>
    %175 = arith.divf %173, %174 : vector<16x1xf32>
    %176 = vector.broadcast %168 : vector<16x1xf32> to vector<16x32xf32>
    %177 = arith.subf %162, %176 : vector<16x32xf32>
    %cst_36 = arith.constant 9.99999997E-7 : f32
    %178 = vector.broadcast %cst_36 : f32 to vector<16x1xf32>
    %179 = arith.addf %175, %178 : vector<16x1xf32>
    %180 = math.rsqrt %179 : vector<16x1xf32>
    %181 = vector.broadcast %180 : vector<16x1xf32> to vector<16x32xf32>
    %182 = arith.mulf %177, %181 : vector<16x32xf32>
    %183 = vector.broadcast %163 : vector<1x32xf32> to vector<16x32xf32>
    %184 = arith.mulf %182, %183 : vector<16x32xf32>
    %185 = vector.broadcast %164 : vector<1x32xf32> to vector<16x32xf32>
    %186 = arith.addf %184, %185 : vector<16x32xf32>
    %c0_37 = arith.constant 0 : index
    %c0_38 = arith.constant 0 : index
    %187 = vector.load %arg5[%c0_37, %c0_38] : memref<16x32xf32, #tpu.memory_space<vmem>>, vector<16x32xf32>
    tpu.vector_store %arg5[%c0_37, %c0_38], %186 {strides = array<i32>} : memref<16x32xf32, #tpu.memory_space<vmem>>, vector<16x32xf32>,
    return
  }
}

</mosaic_0001>

<llo_original>
// kernel: tpu_custom_call.1
$region0: #{tpu_custom_call.1}
  #allocation0 [shape = 'u32[]', space=smem, size = 0x4, offset = 0x4, fixed_abs, tag = 'smem constant byte address 0x4 - core index']
  #allocation1 [shape = 'u32[144,128]{1,0:T(1,128)}', space=vmem, size = 0x12000, scoped, tag = 'internal scratch']
  %s0 = inlined_call_operand.vmem [shape: f32[16,32], index: 0, kind: input, shape index: {}]
  %s1 = inlined_call_operand.vmem [shape: f32[32,128], index: 1, kind: input, shape index: {}]
  %s2 = inlined_call_operand.vmem [shape: f32[32,96], index: 2, kind: input, shape index: {}]
  %s3 = inlined_call_operand.vmem [shape: f32[64,32], index: 3, kind: input, shape index: {}]
  %s4 = inlined_call_operand.vmem [shape: f32[8,128], index: 4, kind: input, shape index: {}]
  %s5 = inlined_call_operand.hbm [shape: f32[16,32], index: 5, kind: output, shape index: {}]
  %s6 = sld [smem:[#allocation0]]
  $region30: #{tpu_custom_call.1} parent=0
    _
  %s8 = ssub.s32 1, %s6
  %s9 = scalar_select 0, %s8, %s6
  $region1: #{tpu_custom_call.1} parent=0
    #allocation2 [shape = 'u8[8192]{0}', space=vmem, size = 0x2000, scoped, tag = 'output window, operand 0, single buffered']
    #allocation3 [shape = 's32[1]{0}', space=sflag, size = 0x4, scoped, tag = 'scoped memory for tpu_custom_call.1']
    %10 = vsyncpa [#allocation3], 0
    // Predicated region
    $region2: #{tpu_custom_call.1} parent=1 // pred_check
      _
    $region3: #{tpu_custom_call.1} parent=1 // pred_check_branch
      %12 = sbr.rel (0) target = $region5
    $region4: #{tpu_custom_call.1} parent=1 // pred_region
      _
    $region5: #{tpu_custom_call.1} parent=1 // pred_fallthru
      _
    // Predicated region
    $region6: #{tpu_custom_call.1} parent=1 // pred_check
      _
    $region7: #{tpu_custom_call.1} parent=1 // pred_check_branch
      %14 = sbr.rel (0) target = $region9
    $region8: #{tpu_custom_call.1} parent=1 // pred_region
      _
    $region9: #{tpu_custom_call.1} parent=1 // pred_fallthru
      _
    // Predicated region
    $region10: #{tpu_custom_call.1} parent=1 // pred_check
      _
    $region11: #{tpu_custom_call.1} parent=1 // pred_check_branch
      %16 = sbr.rel (0) target = $region13
    $region12: #{tpu_custom_call.1} parent=1 // pred_region
      _
    $region13: #{tpu_custom_call.1} parent=1 // pred_fallthru
      _
    // Predicated region
    $region14: #{tpu_custom_call.1} parent=1 // pred_check
      _
    $region15: #{tpu_custom_call.1} parent=1 // pred_check_branch
      %18 = sbr.rel (0) target = $region17
    $region16: #{tpu_custom_call.1} parent=1 // pred_region
      _
    $region17: #{tpu_custom_call.1} parent=1 // pred_fallthru
      _
    // Predicated region
    $region18: #{tpu_custom_call.1} parent=1 // pred_check
      _
    $region19: #{tpu_custom_call.1} parent=1 // pred_check_branch
      %20 = sbr.rel (0) target = $region21
    $region20: #{tpu_custom_call.1} parent=1 // pred_region
      _
    $region21: #{tpu_custom_call.1} parent=1 // pred_fallthru
      _
    %v21 = vld [vmem:[%s0] sm:$0xff]
    %v22 = vld [vmem:[%s0 + $0x8] sm:$0xff]
    %v23 = vld [vmem:[%s4] sm:$0xff]
    %v24 = vld [vmem:[%s1] sm:$0xff]
    %v25 = vld [vmem:[%s1 + $0x8] sm:$0xff]
    %v26 = vld [vmem:[%s1 + $0x10] sm:$0xff]
    %v27 = vld [vmem:[%s1 + $0x18] sm:$0xff]
    %v28 = vlaneseq
    %v29 = vshrl.u32 %v28, 7
    %v30 = vsub.s32 0, %v29
    %v31 = vrot.slane %v23, %v30
    %vm32 = vcmask 261120
    %v34 = vsel %vm32, %v21, 0
    %v37 = vsel %vm32, %v22, 0
    %39 = vmatprep.subr.mxu0 0.0
    %40 = vmatpush1.msra.mxu0 %v24
    %41 = vmatprep.subr.mxu0 0.0
    %42 = vmatpush1.msra.mxu0 %v25
    %43 = vmatprep.subr.mxu0 0.0
    %44 = vmatpush1.msra.mxu0 %v26
    %45 = vmatprep.subr.mxu0 0.0
    %46 = vmatpush1.msra.mxu0 %v27
    %47 = vmatprep.subr.mxu0 0.0
    %48 = vmatpush1.msra.mxu0 0.0
    %49 = vmatprep.subr.mxu0 0.0
    %50 = vmatpush1.msra.mxu0 0.0
    %51 = vmatprep.subr.mxu0 0.0
    %52 = vmatpush1.msra.mxu0 0.0
    %53 = vmatprep.subr.mxu0 0.0
    %54 = vmatpush1.msra.mxu0 0.0
    %55 = vmatprep.subr.mxu0 0.0
    %56 = vmatpush1.msra.mxu0 0.0
    %57 = vmatprep.subr.mxu0 0.0
    %58 = vmatpush1.msra.mxu0 0.0
    %59 = vmatprep.subr.mxu0 0.0
    %60 = vmatpush1.msra.mxu0 0.0
    %61 = vmatprep.subr.mxu0 0.0
    %62 = vmatpush1.msra.mxu0 0.0
    %63 = vmatprep.subr.mxu0 0.0
    %64 = vmatpush1.msra.mxu0 0.0
    %65 = vmatprep.subr.mxu0 0.0
    %66 = vmatpush1.msra.mxu0 0.0
    %67 = vmatprep.subr.mxu0 0.0
    %68 = vmatpush1.msra.mxu0 0.0
    %69 = vmatprep.subr.mxu0 0.0
    %70 = vmatpush1.msra.mxu0 0.0
    %71 = vmatprep.subr.mxu0 0.0
    %72 = vmatpush1.msra.mxu0 0.0
    %73 = vmatprep.subr.mxu0 0.0
    %74 = vmatpush1.msra.mxu0 0.0
    %75 = vmatprep.subr.mxu0 0.0
    %76 = vmatpush1.msra.mxu0 0.0
    %77 = vmatprep.subr.mxu0 0.0
    %78 = vmatpush1.msra.mxu0 0.0
    %79 = vmatprep.subr.mxu0 0.0
    %80 = vmatpush1.msra.mxu0 0.0
    %81 = vmatprep.subr.mxu0 0.0
    %82 = vmatpush1.msra.mxu0 0.0
    %83 = vmatprep.subr.mxu0 0.0
    %84 = vmatpush1.msra.mxu0 0.0
    %85 = vmatprep.subr.mxu0 0.0
    %86 = vmatpush1.msra.mxu0 0.0
    %87 = vmatprep.subr.mxu0 0.0
    %88 = vmatpush1.msra.mxu0 0.0
    %89 = vmatprep.subr.mxu0 0.0
    %90 = vmatpush1.msra.mxu0 0.0
    %91 = vmatprep.subr.mxu0 0.0
    %92 = vmatpush1.msra.mxu0 0.0
    %93 = vmatprep.subr.mxu0 0.0
    %94 = vmatpush1.msra.mxu0 0.0
    %95 = vmatprep.subr.mxu0 0.0
    %96 = vmatpush1.msra.mxu0 0.0
    %97 = vmatprep.subr.mxu0 0.0
    %98 = vmatpush1.msra.mxu0 0.0
    %99 = vmatprep.subr.mxu0 0.0
    %100 = vmatpush1.msra.mxu0 0.0
    %101 = vmatprep.subr.mxu0 0.0
    %102 = vmatpush1.msra.mxu0 0.0
    %103 = vmatprep.mubr.f32.mxu0 0.0
    %104 = vmatmul.mubr.f32.gmra.mrb[0].mxu0 %v34
    %v105 = vpop.f32.mrb[0].mxu0
    %v106 = vadd.f32 %v31, %v105
    %v107 = vpop.f32.mrb[0].mxu0
    %108 = vmatprep.mubr.f32.mxu0 0.0
    %109 = vmatmul.mubr.f32.gmra.mrb[0].mxu0 %v37
    %v110 = vpop.f32.mrb[0].mxu0
    %v111 = vadd.f32 %v31, %v110
    %v112 = vpop.f32.mrb[0].mxu0
    %113 = vdwg.mxu0
    %116 = vrot.lane.b32.xlu0 %v106, 120
    %v117 = vpop.permute.xlu0 %116
    %118 = vrot.lane.b32.xlu0 %v111, 120
    %v119 = vpop.permute.xlu0 %118
    %120 = vrot.lane.b32.xlu0 %v106, 112
    %v121 = vpop.permute.xlu0 %120
    %122 = vrot.lane.b32.xlu0 %v111, 112
    %v123 = vpop.permute.xlu0 %122
    %124 = vrot.lane.b32.xlu0 %v106, 104
    %v125 = vpop.permute.xlu0 %124
    %126 = vrot.lane.b32.xlu0 %v111, 104
    %v127 = vpop.permute.xlu0 %126
    %128 = vrot.lane.b32.xlu0 %v106, 32
    %v129 = vpop.permute.xlu0 %128
    %130 = vrot.lane.b32.xlu0 %v111, 32
    %v131 = vpop.permute.xlu0 %130
    %132 = vrot.lane.b32.xlu0 %v117, 32
    %v133 = vpop.permute.xlu0 %132
    %134 = vrot.lane.b32.xlu0 %v119, 32
    %v135 = vpop.permute.xlu0 %134
    %136 = vrot.lane.b32.xlu0 %v121, 32
    %v137 = vpop.permute.xlu0 %136
    %138 = vrot.lane.b32.xlu0 %v123, 32
    %v139 = vpop.permute.xlu0 %138
    %140 = vrot.lane.b32.xlu0 %v125, 32
    %v141 = vpop.permute.xlu0 %140
    %142 = vrot.lane.b32.xlu0 %v127, 32
    %v143 = vpop.permute.xlu0 %142
    %vm152 = vcmask 64512
    %v153 = vsel %vm152, %v129, 0.0
    %v154 = vsel %vm152, %v131, 0.0
    %v155 = vsel %vm152, %v133, 0.0
    %v156 = vsel %vm152, %v135, 0.0
    %v157 = vsel %vm152, %v137, 0.0
    %v158 = vsel %vm152, %v139, 0.0
    %v159 = vsel %vm152, %v141, 0.0
    %v160 = vsel %vm152, %v143, 0.0
    %v161 = vlaneseq
    %v162 = vshrl.u32 %v161, 7
    %vm163 = vcmp.eq.s32.totalorder %v162, 0
    %v164 = vsel %vm163, %v153, 0.0
    %v165 = vsel %vm163, %v154, 0.0
    %v166 = vsel %vm163, %v155, 0.0
    %v167 = vsel %vm163, %v156, 0.0
    %v168 = vsel %vm163, %v157, 0.0
    %v169 = vsel %vm163, %v158, 0.0
    %v170 = vsel %vm163, %v159, 0.0
    %v171 = vsel %vm163, %v160, 0.0
    %v172 = vadd.f32 %v164, 0.0
    %v173 = vadd.f32 %v165, 0.0
    %v174 = vadd.f32 %v166, 0.0
    %v175 = vadd.f32 %v167, 0.0
    %v176 = vadd.f32 %v168, 0.0
    %v177 = vadd.f32 %v169, 0.0
    %v178 = vadd.f32 %v170, 0.0
    %v179 = vadd.f32 %v171, 0.0
    %vm180 = vcmp.eq.s32.totalorder %v162, 1
    %v181 = vsel %vm180, %v153, 0.0
    %v182 = vsel %vm180, %v154, 0.0
    %v183 = vsel %vm180, %v155, 0.0
    %v184 = vsel %vm180, %v156, 0.0
    %v185 = vsel %vm180, %v157, 0.0
    %v186 = vsel %vm180, %v158, 0.0
    %v187 = vsel %vm180, %v159, 0.0
    %v188 = vsel %vm180, %v160, 0.0
    %197 = vrot.lane.b32.xlu0 %v181, 1
    %v198 = vpop.permute.xlu0 %197
    %199 = vrot.lane.b32.xlu0 %v182, 1
    %v200 = vpop.permute.xlu0 %199
    %201 = vrot.lane.b32.xlu0 %v183, 1
    %v202 = vpop.permute.xlu0 %201
    %203 = vrot.lane.b32.xlu0 %v184, 1
    %v204 = vpop.permute.xlu0 %203
    %205 = vrot.lane.b32.xlu0 %v185, 1
    %v206 = vpop.permute.xlu0 %205
    %207 = vrot.lane.b32.xlu0 %v186, 1
    %v208 = vpop.permute.xlu0 %207
    %209 = vrot.lane.b32.xlu0 %v187, 1
    %v210 = vpop.permute.xlu0 %209
    %211 = vrot.lane.b32.xlu0 %v188, 1
    %v212 = vpop.permute.xlu0 %211
    %v221 = vadd.f32 %v172, %v198
    %v222 = vadd.f32 %v173, %v200
    %v223 = vadd.f32 %v174, %v202
    %v224 = vadd.f32 %v175, %v204
    %v225 = vadd.f32 %v176, %v206
    %v226 = vadd.f32 %v177, %v208
    %v227 = vadd.f32 %v178, %v210
    %v228 = vadd.f32 %v179, %v212
    %vm229 = vcmp.eq.s32.totalorder %v162, 2
    %v230 = vsel %vm229, %v153, 0.0
    %v231 = vsel %vm229, %v154, 0.0
    %v232 = vsel %vm229, %v155, 0.0
    %v233 = vsel %vm229, %v156, 0.0
    %v234 = vsel %vm229, %v157, 0.0
    %v235 = vsel %vm229, %v158, 0.0
    %v236 = vsel %vm229, %v159, 0.0
    %v237 = vsel %vm229, %v160, 0.0
    %246 = vrot.lane.b32.xlu0 %v230, 2
    %v247 = vpop.permute.xlu0 %246
    %248 = vrot.lane.b32.xlu0 %v231, 2
    %v249 = vpop.permute.xlu0 %248
    %250 = vrot.lane.b32.xlu0 %v232, 2
    %v251 = vpop.permute.xlu0 %250
    %252 = vrot.lane.b32.xlu0 %v233, 2
    %v253 = vpop.permute.xlu0 %252
    %254 = vrot.lane.b32.xlu0 %v234, 2
    %v255 = vpop.permute.xlu0 %254
    %256 = vrot.lane.b32.xlu0 %v235, 2
    %v257 = vpop.permute.xlu0 %256
    %258 = vrot.lane.b32.xlu0 %v236, 2
    %v259 = vpop.permute.xlu0 %258
    %260 = vrot.lane.b32.xlu0 %v237, 2
    %v261 = vpop.permute.xlu0 %260
    %v270 = vadd.f32 %v221, %v247
    %v271 = vadd.f32 %v222, %v249
    %v272 = vadd.f32 %v223, %v251
    %v273 = vadd.f32 %v224, %v253
    %v274 = vadd.f32 %v225, %v255
    %v275 = vadd.f32 %v226, %v257
    %v276 = vadd.f32 %v227, %v259
    %v277 = vadd.f32 %v228, %v261
    %vm278 = vcmp.eq.s32.totalorder %v162, 3
    %v279 = vsel %vm278, %v153, 0.0
    %v280 = vsel %vm278, %v154, 0.0
    %v281 = vsel %vm278, %v155, 0.0
    %v282 = vsel %vm278, %v156, 0.0
    %v283 = vsel %vm278, %v157, 0.0
    %v284 = vsel %vm278, %v158, 0.0
    %v285 = vsel %vm278, %v159, 0.0
    %v286 = vsel %vm278, %v160, 0.0
    %295 = vrot.lane.b32.xlu0 %v279, 3
    %v296 = vpop.permute.xlu0 %295
    %297 = vrot.lane.b32.xlu0 %v280, 3
    %v298 = vpop.permute.xlu0 %297
    %299 = vrot.lane.b32.xlu0 %v281, 3
    %v300 = vpop.permute.xlu0 %299
    %301 = vrot.lane.b32.xlu0 %v282, 3
    %v302 = vpop.permute.xlu0 %301
    %303 = vrot.lane.b32.xlu0 %v283, 3
    %v304 = vpop.permute.xlu0 %303
    %305 = vrot.lane.b32.xlu0 %v284, 3
    %v306 = vpop.permute.xlu0 %305
    %307 = vrot.lane.b32.xlu0 %v285, 3
    %v308 = vpop.permute.xlu0 %307
    %309 = vrot.lane.b32.xlu0 %v286, 3
    %v310 = vpop.permute.xlu0 %309
    %v319 = vadd.f32 %v270, %v296
    %v320 = vadd.f32 %v271, %v298
    %v321 = vadd.f32 %v272, %v300
    %v322 = vadd.f32 %v273, %v302
    %v323 = vadd.f32 %v274, %v304
    %v324 = vadd.f32 %v275, %v306
    %v325 = vadd.f32 %v276, %v308
    %v326 = vadd.f32 %v277, %v310
    %vm327 = vcmp.eq.s32.totalorder %v162, 4
    %v328 = vsel %vm327, %v153, 0.0
    %v329 = vsel %vm327, %v154, 0.0
    %v330 = vsel %vm327, %v155, 0.0
    %v331 = vsel %vm327, %v156, 0.0
    %v332 = vsel %vm327, %v157, 0.0
    %v333 = vsel %vm327, %v158, 0.0
    %v334 = vsel %vm327, %v159, 0.0
    %v335 = vsel %vm327, %v160, 0.0
    %344 = vrot.lane.b32.xlu0 %v328, 4
    %v345 = vpop.permute.xlu0 %344
    %346 = vrot.lane.b32.xlu0 %v329, 4
    %v347 = vpop.permute.xlu0 %346
    %348 = vrot.lane.b32.xlu0 %v330, 4
    %v349 = vpop.permute.xlu0 %348
    %350 = vrot.lane.b32.xlu0 %v331, 4
    %v351 = vpop.permute.xlu0 %350
    %352 = vrot.lane.b32.xlu0 %v332, 4
    %v353 = vpop.permute.xlu0 %352
    %354 = vrot.lane.b32.xlu0 %v333, 4
    %v355 = vpop.permute.xlu0 %354
    %356 = vrot.lane.b32.xlu0 %v334, 4
    %v357 = vpop.permute.xlu0 %356
    %358 = vrot.lane.b32.xlu0 %v335, 4
    %v359 = vpop.permute.xlu0 %358
    %v368 = vadd.f32 %v319, %v345
    %v369 = vadd.f32 %v320, %v347
    %v370 = vadd.f32 %v321, %v349
    %v371 = vadd.f32 %v322, %v351
    %v372 = vadd.f32 %v323, %v353
    %v373 = vadd.f32 %v324, %v355
    %v374 = vadd.f32 %v325, %v357
    %v375 = vadd.f32 %v326, %v359
    %vm376 = vcmp.eq.s32.totalorder %v162, 5
    %v377 = vsel %vm376, %v153, 0.0
    %v378 = vsel %vm376, %v154, 0.0
    %v379 = vsel %vm376, %v155, 0.0
    %v380 = vsel %vm376, %v156, 0.0
    %v381 = vsel %vm376, %v157, 0.0
    %v382 = vsel %vm376, %v158, 0.0
    %v383 = vsel %vm376, %v159, 0.0
    %v384 = vsel %vm376, %v160, 0.0
    %393 = vrot.lane.b32.xlu0 %v377, 5
    %v394 = vpop.permute.xlu0 %393
    %395 = vrot.lane.b32.xlu0 %v378, 5
    %v396 = vpop.permute.xlu0 %395
    %397 = vrot.lane.b32.xlu0 %v379, 5
    %v398 = vpop.permute.xlu0 %397
    %399 = vrot.lane.b32.xlu0 %v380, 5
    %v400 = vpop.permute.xlu0 %399
    %401 = vrot.lane.b32.xlu0 %v381, 5
    %v402 = vpop.permute.xlu0 %401
    %403 = vrot.lane.b32.xlu0 %v382, 5
    %v404 = vpop.permute.xlu0 %403
    %405 = vrot.lane.b32.xlu0 %v383, 5
    %v406 = vpop.permute.xlu0 %405
    %407 = vrot.lane.b32.xlu0 %v384, 5
    %v408 = vpop.permute.xlu0 %407
    %v417 = vadd.f32 %v368, %v394
    %v418 = vadd.f32 %v369, %v396
    %v419 = vadd.f32 %v370, %v398
    %v420 = vadd.f32 %v371, %v400
    %v421 = vadd.f32 %v372, %v402
    %v422 = vadd.f32 %v373, %v404
    %v423 = vadd.f32 %v374, %v406
    %v424 = vadd.f32 %v375, %v408
    %vm425 = vcmp.eq.s32.totalorder %v162, 6
    %v426 = vsel %vm425, %v153, 0.0
    %v427 = vsel %vm425, %v154, 0.0
    %v428 = vsel %vm425, %v155, 0.0
    %v429 = vsel %vm425, %v156, 0.0
    %v430 = vsel %vm425, %v157, 0.0
    %v431 = vsel %vm425, %v158, 0.0
    %v432 = vsel %vm425, %v159, 0.0
    %v433 = vsel %vm425, %v160, 0.0
    %442 = vrot.lane.b32.xlu0 %v426, 6
    %v443 = vpop.permute.xlu0 %442
    %444 = vrot.lane.b32.xlu0 %v427, 6
    %v445 = vpop.permute.xlu0 %444
    %446 = vrot.lane.b32.xlu0 %v428, 6
    %v447 = vpop.permute.xlu0 %446
    %448 = vrot.lane.b32.xlu0 %v429, 6
    %v449 = vpop.permute.xlu0 %448
    %450 = vrot.lane.b32.xlu0 %v430, 6
    %v451 = vpop.permute.xlu0 %450
    %452 = vrot.lane.b32.xlu0 %v431, 6
    %v453 = vpop.permute.xlu0 %452
    %454 = vrot.lane.b32.xlu0 %v432, 6
    %v455 = vpop.permute.xlu0 %454
    %456 = vrot.lane.b32.xlu0 %v433, 6
    %v457 = vpop.permute.xlu0 %456
    %v466 = vadd.f32 %v417, %v443
    %v467 = vadd.f32 %v418, %v445
    %v468 = vadd.f32 %v419, %v447
    %v469 = vadd.f32 %v420, %v449
    %v470 = vadd.f32 %v421, %v451
    %v471 = vadd.f32 %v422, %v453
    %v472 = vadd.f32 %v423, %v455
    %v473 = vadd.f32 %v424, %v457
    %vm474 = vcmp.eq.s32.totalorder %v162, 7
    %v475 = vsel %vm474, %v153, 0.0
    %v476 = vsel %vm474, %v154, 0.0
    %v477 = vsel %vm474, %v155, 0.0
    %v478 = vsel %vm474, %v156, 0.0
    %v479 = vsel %vm474, %v157, 0.0
    %v480 = vsel %vm474, %v158, 0.0
    %v481 = vsel %vm474, %v159, 0.0
    %v482 = vsel %vm474, %v160, 0.0
    %491 = vrot.lane.b32.xlu0 %v475, 7
    %v492 = vpop.permute.xlu0 %491
    %493 = vrot.lane.b32.xlu0 %v476, 7
    %v494 = vpop.permute.xlu0 %493
    %495 = vrot.lane.b32.xlu0 %v477, 7
    %v496 = vpop.permute.xlu0 %495
    %497 = vrot.lane.b32.xlu0 %v478, 7
    %v498 = vpop.permute.xlu0 %497
    %499 = vrot.lane.b32.xlu0 %v479, 7
    %v500 = vpop.permute.xlu0 %499
    %501 = vrot.lane.b32.xlu0 %v480, 7
    %v502 = vpop.permute.xlu0 %501
    %503 = vrot.lane.b32.xlu0 %v481, 7
    %v504 = vpop.permute.xlu0 %503
    %505 = vrot.lane.b32.xlu0 %v482, 7
    %v506 = vpop.permute.xlu0 %505
    %v515 = vadd.f32 %v466, %v492
    %v516 = vadd.f32 %v467, %v494
    %v517 = vadd.f32 %v468, %v496
    %v518 = vadd.f32 %v469, %v498
    %v519 = vadd.f32 %v470, %v500
    %v520 = vadd.f32 %v471, %v502
    %v521 = vadd.f32 %v472, %v504
    %v522 = vadd.f32 %v473, %v506
    %523 = vrot.lane.b32.xlu0 %v106, 96
    %v524 = vpop.permute.xlu0 %523
    %526 = vrot.lane.b32.xlu0 %v515, 121
    %v527 = vpop.permute.xlu0 %526
    %v529 = vsel %vm152, %v106, 0
    %v531 = vsel %vm152, %v524, 0
    %533 = vmatprep.subr.mxu0 0.0
    %534 = vmatpush1.xpose.msra.mxu0 %v531
    %535 = vmatprep.subr.mxu0 0.0
    %536 = vmatpush1.xpose.msra.mxu0 0.0
    %537 = vmatprep.subr.mxu0 0.0
    %538 = vmatpush1.xpose.msra.mxu0 0.0
    %539 = vmatprep.subr.mxu0 0.0
    %540 = vmatpush1.xpose.msra.mxu0 0.0
    %541 = vmatprep.subr.mxu0 0.0
    %542 = vmatpush1.xpose.msra.mxu0 0.0
    %543 = vmatprep.subr.mxu0 0.0
    %544 = vmatpush1.xpose.msra.mxu0 0.0
    %545 = vmatprep.subr.mxu0 0.0
    %546 = vmatpush1.xpose.msra.mxu0 0.0
    %547 = vmatprep.subr.mxu0 0.0
    %548 = vmatpush1.xpose.msra.mxu0 0.0
    %549 = vmatprep.subr.mxu0 0.0
    %550 = vmatpush1.xpose.msra.mxu0 0.0
    %551 = vmatprep.subr.mxu0 0.0
    %552 = vmatpush1.xpose.msra.mxu0 0.0
    %553 = vmatprep.subr.mxu0 0.0
    %554 = vmatpush1.xpose.msra.mxu0 0.0
    %555 = vmatprep.subr.mxu0 0.0
    %556 = vmatpush1.xpose.msra.mxu0 0.0
    %557 = vmatprep.subr.mxu0 0.0
    %558 = vmatpush1.xpose.msra.mxu0 0.0
    %559 = vmatprep.subr.mxu0 0.0
    %560 = vmatpush1.xpose.msra.mxu0 0.0
    %561 = vmatprep.subr.mxu0 0.0
    %562 = vmatpush1.xpose.msra.mxu0 0.0
    %563 = vmatprep.subr.mxu0 0.0
    %564 = vmatpush1.xpose.msra.mxu0 0.0
    %565 = vmatprep.subr.mxu0 0.0
    %566 = vmatpush1.xpose.msra.mxu0 0.0
    %567 = vmatprep.subr.mxu0 0.0
    %568 = vmatpush1.xpose.msra.mxu0 0.0
    %569 = vmatprep.subr.mxu0 0.0
    %570 = vmatpush1.xpose.msra.mxu0 0.0
    %571 = vmatprep.subr.mxu0 0.0
    %572 = vmatpush1.xpose.msra.mxu0 0.0
    %573 = vmatprep.subr.mxu0 0.0
    %574 = vmatpush1.xpose.msra.mxu0 0.0
    %575 = vmatprep.subr.mxu0 0.0
    %576 = vmatpush1.xpose.msra.mxu0 0.0
    %577 = vmatprep.subr.mxu0 0.0
    %578 = vmatpush1.xpose.msra.mxu0 0.0
    %579 = vmatprep.subr.mxu0 0.0
    %580 = vmatpush1.xpose.msra.mxu0 0.0
    %581 = vmatprep.subr.mxu0 0.0
    %582 = vmatpush1.xpose.msra.mxu0 0.0
    %583 = vmatprep.subr.mxu0 0.0
    %584 = vmatpush1.xpose.msra.mxu0 0.0
    %585 = vmatprep.subr.mxu0 0.0
    %586 = vmatpush1.xpose.msra.mxu0 0.0
    %587 = vmatprep.subr.mxu0 0.0
    %588 = vmatpush1.xpose.msra.mxu0 0.0
    %589 = vmatprep.subr.mxu0 0.0
    %590 = vmatpush1.xpose.msra.mxu0 0.0
    %591 = vmatprep.subr.mxu0 0.0
    %592 = vmatpush1.xpose.msra.mxu0 0.0
    %593 = vmatprep.subr.mxu0 0.0
    %594 = vmatpush1.xpose.msra.mxu0 0.0
    %595 = vmatprep.subr.mxu0 0.0
    %596 = vmatpush1.xpose.msra.mxu0 0.0
    %597 = vmatprep.mubr.f32.mxu0 0.0
    %598 = vmatmul.mubr.f32.gmra.mrb[0].mxu0 %v529
    %v599 = vpop.f32.mrb[0].mxu0
    %v600 = vadd.f32 %v527, %v599
    %v601 = vpop.f32.mrb[0].mxu0
    %602 = vdwg.mxu0
    %603 = vrot.lane.b32.xlu0 %v111, 96
    %v604 = vpop.permute.xlu0 %603
    %606 = vrot.lane.b32.xlu0 %v516, 121
    %v607 = vpop.permute.xlu0 %606
    %v609 = vsel %vm152, %v111, 0
    %v611 = vsel %vm152, %v604, 0
    %613 = vmatprep.subr.mxu0 0.0
    %614 = vmatpush1.xpose.msra.mxu0 %v611
    %615 = vmatprep.subr.mxu0 0.0
    %616 = vmatpush1.xpose.msra.mxu0 0.0
    %617 = vmatprep.subr.mxu0 0.0
    %618 = vmatpush1.xpose.msra.mxu0 0.0
    %619 = vmatprep.subr.mxu0 0.0
    %620 = vmatpush1.xpose.msra.mxu0 0.0
    %621 = vmatprep.subr.mxu0 0.0
    %622 = vmatpush1.xpose.msra.mxu0 0.0
    %623 = vmatprep.subr.mxu0 0.0
    %624 = vmatpush1.xpose.msra.mxu0 0.0
    %625 = vmatprep.subr.mxu0 0.0
    %626 = vmatpush1.xpose.msra.mxu0 0.0
    %627 = vmatprep.subr.mxu0 0.0
    %628 = vmatpush1.xpose.msra.mxu0 0.0
    %629 = vmatprep.subr.mxu0 0.0
    %630 = vmatpush1.xpose.msra.mxu0 0.0
    %631 = vmatprep.subr.mxu0 0.0
    %632 = vmatpush1.xpose.msra.mxu0 0.0
    %633 = vmatprep.subr.mxu0 0.0
    %634 = vmatpush1.xpose.msra.mxu0 0.0
    %635 = vmatprep.subr.mxu0 0.0
    %636 = vmatpush1.xpose.msra.mxu0 0.0
    %637 = vmatprep.subr.mxu0 0.0
    %638 = vmatpush1.xpose.msra.mxu0 0.0
    %639 = vmatprep.subr.mxu0 0.0
    %640 = vmatpush1.xpose.msra.mxu0 0.0
    %641 = vmatprep.subr.mxu0 0.0
    %642 = vmatpush1.xpose.msra.mxu0 0.0
    %643 = vmatprep.subr.mxu0 0.0
    %644 = vmatpush1.xpose.msra.mxu0 0.0
    %645 = vmatprep.subr.mxu0 0.0
    %646 = vmatpush1.xpose.msra.mxu0 0.0
    %647 = vmatprep.subr.mxu0 0.0
    %648 = vmatpush1.xpose.msra.mxu0 0.0
    %649 = vmatprep.subr.mxu0 0.0
    %650 = vmatpush1.xpose.msra.mxu0 0.0
    %651 = vmatprep.subr.mxu0 0.0
    %652 = vmatpush1.xpose.msra.mxu0 0.0
    %653 = vmatprep.subr.mxu0 0.0
    %654 = vmatpush1.xpose.msra.mxu0 0.0
    %655 = vmatprep.subr.mxu0 0.0
    %656 = vmatpush1.xpose.msra.mxu0 0.0
    %657 = vmatprep.subr.mxu0 0.0
    %658 = vmatpush1.xpose.msra.mxu0 0.0
    %659 = vmatprep.subr.mxu0 0.0
    %660 = vmatpush1.xpose.msra.mxu0 0.0
    %661 = vmatprep.subr.mxu0 0.0
    %662 = vmatpush1.xpose.msra.mxu0 0.0
    %663 = vmatprep.subr.mxu0 0.0
    %664 = vmatpush1.xpose.msra.mxu0 0.0
    %665 = vmatprep.subr.mxu0 0.0
    %666 = vmatpush1.xpose.msra.mxu0 0.0
    %667 = vmatprep.subr.mxu0 0.0
    %668 = vmatpush1.xpose.msra.mxu0 0.0
    %669 = vmatprep.subr.mxu0 0.0
    %670 = vmatpush1.xpose.msra.mxu0 0.0
    %671 = vmatprep.subr.mxu0 0.0
    %672 = vmatpush1.xpose.msra.mxu0 0.0
    %673 = vmatprep.subr.mxu0 0.0
    %674 = vmatpush1.xpose.msra.mxu0 0.0
    %675 = vmatprep.subr.mxu0 0.0
    %676 = vmatpush1.xpose.msra.mxu0 0.0
    %677 = vmatprep.mubr.f32.mxu0 0.0
    %678 = vmatmul.mubr.f32.gmra.mrb[0].mxu0 %v609
    %v679 = vpop.f32.mrb[0].mxu0
    %v680 = vadd.f32 %v607, %v679
    %v681 = vpop.f32.mrb[0].mxu0
    %682 = vdwg.mxu0
    %683 = vrot.lane.b32.xlu0 %v117, 96
    %v684 = vpop.permute.xlu0 %683
    %686 = vrot.lane.b32.xlu0 %v517, 121
    %v687 = vpop.permute.xlu0 %686
    %v689 = vsel %vm152, %v117, 0
    %v691 = vsel %vm152, %v684, 0
    %693 = vmatprep.subr.mxu0 0.0
    %694 = vmatpush1.xpose.msra.mxu0 %v691
    %695 = vmatprep.subr.mxu0 0.0
    %696 = vmatpush1.xpose.msra.mxu0 0.0
    %697 = vmatprep.subr.mxu0 0.0
    %698 = vmatpush1.xpose.msra.mxu0 0.0
    %699 = vmatprep.subr.mxu0 0.0
    %700 = vmatpush1.xpose.msra.mxu0 0.0
    %701 = vmatprep.subr.mxu0 0.0
    %702 = vmatpush1.xpose.msra.mxu0 0.0
    %703 = vmatprep.subr.mxu0 0.0
    %704 = vmatpush1.xpose.msra.mxu0 0.0
    %705 = vmatprep.subr.mxu0 0.0
    %706 = vmatpush1.xpose.msra.mxu0 0.0
    %707 = vmatprep.subr.mxu0 0.0
    %708 = vmatpush1.xpose.msra.mxu0 0.0
    %709 = vmatprep.subr.mxu0 0.0
    %710 = vmatpush1.xpose.msra.mxu0 0.0
    %711 = vmatprep.subr.mxu0 0.0
    %712 = vmatpush1.xpose.msra.mxu0 0.0
    %713 = vmatprep.subr.mxu0 0.0
    %714 = vmatpush1.xpose.msra.mxu0 0.0
    %715 = vmatprep.subr.mxu0 0.0
    %716 = vmatpush1.xpose.msra.mxu0 0.0
    %717 = vmatprep.subr.mxu0 0.0
    %718 = vmatpush1.xpose.msra.mxu0 0.0
    %719 = vmatprep.subr.mxu0 0.0
    %720 = vmatpush1.xpose.msra.mxu0 0.0
    %721 = vmatprep.subr.mxu0 0.0
    %722 = vmatpush1.xpose.msra.mxu0 0.0
    %723 = vmatprep.subr.mxu0 0.0
    %724 = vmatpush1.xpose.msra.mxu0 0.0
    %725 = vmatprep.subr.mxu0 0.0
    %726 = vmatpush1.xpose.msra.mxu0 0.0
    %727 = vmatprep.subr.mxu0 0.0
    %728 = vmatpush1.xpose.msra.mxu0 0.0
    %729 = vmatprep.subr.mxu0 0.0
    %730 = vmatpush1.xpose.msra.mxu0 0.0
    %731 = vmatprep.subr.mxu0 0.0
    %732 = vmatpush1.xpose.msra.mxu0 0.0
    %733 = vmatprep.subr.mxu0 0.0
    %734 = vmatpush1.xpose.msra.mxu0 0.0
    %735 = vmatprep.subr.mxu0 0.0
    %736 = vmatpush1.xpose.msra.mxu0 0.0
    %737 = vmatprep.subr.mxu0 0.0
    %738 = vmatpush1.xpose.msra.mxu0 0.0
    %739 = vmatprep.subr.mxu0 0.0
    %740 = vmatpush1.xpose.msra.mxu0 0.0
    %741 = vmatprep.subr.mxu0 0.0
    %742 = vmatpush1.xpose.msra.mxu0 0.0
    %743 = vmatprep.subr.mxu0 0.0
    %744 = vmatpush1.xpose.msra.mxu0 0.0
    %745 = vmatprep.subr.mxu0 0.0
    %746 = vmatpush1.xpose.msra.mxu0 0.0
    %747 = vmatprep.subr.mxu0 0.0
    %748 = vmatpush1.xpose.msra.mxu0 0.0
    %749 = vmatprep.subr.mxu0 0.0
    %750 = vmatpush1.xpose.msra.mxu0 0.0
    %751 = vmatprep.subr.mxu0 0.0
    %752 = vmatpush1.xpose.msra.mxu0 0.0
    %753 = vmatprep.subr.mxu0 0.0
    %754 = vmatpush1.xpose.msra.mxu0 0.0
    %755 = vmatprep.subr.mxu0 0.0
    %756 = vmatpush1.xpose.msra.mxu0 0.0
    %757 = vmatprep.mubr.f32.mxu0 0.0
    %758 = vmatmul.mubr.f32.gmra.mrb[0].mxu0 %v689
    %v759 = vpop.f32.mrb[0].mxu0
    %v760 = vadd.f32 %v687, %v759
    %v761 = vpop.f32.mrb[0].mxu0
    %762 = vdwg.mxu0
    %763 = vrot.lane.b32.xlu0 %v119, 96
    %v764 = vpop.permute.xlu0 %763
    %766 = vrot.lane.b32.xlu0 %v518, 121
    %v767 = vpop.permute.xlu0 %766
    %v769 = vsel %vm152, %v119, 0
    %v771 = vsel %vm152, %v764, 0
    %773 = vmatprep.subr.mxu0 0.0
    %774 = vmatpush1.xpose.msra.mxu0 %v771
    %775 = vmatprep.subr.mxu0 0.0
    %776 = vmatpush1.xpose.msra.mxu0 0.0
    %777 = vmatprep.subr.mxu0 0.0
    %778 = vmatpush1.xpose.msra.mxu0 0.0
    %779 = vmatprep.subr.mxu0 0.0
    %780 = vmatpush1.xpose.msra.mxu0 0.0
    %781 = vmatprep.subr.mxu0 0.0
    %782 = vmatpush1.xpose.msra.mxu0 0.0
    %783 = vmatprep.subr.mxu0 0.0
    %784 = vmatpush1.xpose.msra.mxu0 0.0
    %785 = vmatprep.subr.mxu0 0.0
    %786 = vmatpush1.xpose.msra.mxu0 0.0
    %787 = vmatprep.subr.mxu0 0.0
    %788 = vmatpush1.xpose.msra.mxu0 0.0
    %789 = vmatprep.subr.mxu0 0.0
    %790 = vmatpush1.xpose.msra.mxu0 0.0
    %791 = vmatprep.subr.mxu0 0.0
    %792 = vmatpush1.xpose.msra.mxu0 0.0
    %793 = vmatprep.subr.mxu0 0.0
    %794 = vmatpush1.xpose.msra.mxu0 0.0
    %795 = vmatprep.subr.mxu0 0.0
    %796 = vmatpush1.xpose.msra.mxu0 0.0
    %797 = vmatprep.subr.mxu0 0.0
    %798 = vmatpush1.xpose.msra.mxu0 0.0
    %799 = vmatprep.subr.mxu0 0.0
    %800 = vmatpush1.xpose.msra.mxu0 0.0
    %801 = vmatprep.subr.mxu0 0.0
    %802 = vmatpush1.xpose.msra.mxu0 0.0
    %803 = vmatprep.subr.mxu0 0.0
    %804 = vmatpush1.xpose.msra.mxu0 0.0
    %805 = vmatprep.subr.mxu0 0.0
    %806 = vmatpush1.xpose.msra.mxu0 0.0
    %807 = vmatprep.subr.mxu0 0.0
    %808 = vmatpush1.xpose.msra.mxu0 0.0
    %809 = vmatprep.subr.mxu0 0.0
    %810 = vmatpush1.xpose.msra.mxu0 0.0
    %811 = vmatprep.subr.mxu0 0.0
    %812 = vmatpush1.xpose.msra.mxu0 0.0
    %813 = vmatprep.subr.mxu0 0.0
    %814 = vmatpush1.xpose.msra.mxu0 0.0
    %815 = vmatprep.subr.mxu0 0.0
    %816 = vmatpush1.xpose.msra.mxu0 0.0
    %817 = vmatprep.subr.mxu0 0.0
    %818 = vmatpush1.xpose.msra.mxu0 0.0
    %819 = vmatprep.subr.mxu0 0.0
    %820 = vmatpush1.xpose.msra.mxu0 0.0
    %821 = vmatprep.subr.mxu0 0.0
    %822 = vmatpush1.xpose.msra.mxu0 0.0
    %823 = vmatprep.subr.mxu0 0.0
    %824 = vmatpush1.xpose.msra.mxu0 0.0
    %825 = vmatprep.subr.mxu0 0.0
    %826 = vmatpush1.xpose.msra.mxu0 0.0
    %827 = vmatprep.subr.mxu0 0.0
    %828 = vmatpush1.xpose.msra.mxu0 0.0
    %829 = vmatprep.subr.mxu0 0.0
    %830 = vmatpush1.xpose.msra.mxu0 0.0
    %831 = vmatprep.subr.mxu0 0.0
    %832 = vmatpush1.xpose.msra.mxu0 0.0
    %833 = vmatprep.subr.mxu0 0.0
    %834 = vmatpush1.xpose.msra.mxu0 0.0
    %835 = vmatprep.subr.mxu0 0.0
    %836 = vmatpush1.xpose.msra.mxu0 0.0
    %837 = vmatprep.mubr.f32.mxu0 0.0
    %838 = vmatmul.mubr.f32.gmra.mrb[0].mxu0 %v769
    %v839 = vpop.f32.mrb[0].mxu0
    %v840 = vadd.f32 %v767, %v839
    %v841 = vpop.f32.mrb[0].mxu0
    %842 = vdwg.mxu0
    %843 = vrot.lane.b32.xlu0 %v121, 96
    %v844 = vpop.permute.xlu0 %843
    %846 = vrot.lane.b32.xlu0 %v519, 121
    %v847 = vpop.permute.xlu0 %846
    %v849 = vsel %vm152, %v121, 0
    %v851 = vsel %vm152, %v844, 0
    %853 = vmatprep.subr.mxu0 0.0
    %854 = vmatpush1.xpose.msra.mxu0 %v851
    %855 = vmatprep.subr.mxu0 0.0
    %856 = vmatpush1.xpose.msra.mxu0 0.0
    %857 = vmatprep.subr.mxu0 0.0
    %858 = vmatpush1.xpose.msra.mxu0 0.0
    %859 = vmatprep.subr.mxu0 0.0
    %860 = vmatpush1.xpose.msra.mxu0 0.0
    %861 = vmatprep.subr.mxu0 0.0
    %862 = vmatpush1.xpose.msra.mxu0 0.0
    %863 = vmatprep.subr.mxu0 0.0
    %864 = vmatpush1.xpose.msra.mxu0 0.0
    %865 = vmatprep.subr.mxu0 0.0
    %866 = vmatpush1.xpose.msra.mxu0 0.0
    %867 = vmatprep.subr.mxu0 0.0
    %868 = vmatpush1.xpose.msra.mxu0 0.0
    %869 = vmatprep.subr.mxu0 0.0
    %870 = vmatpush1.xpose.msra.mxu0 0.0
    %871 = vmatprep.subr.mxu0 0.0
    %872 = vmatpush1.xpose.msra.mxu0 0.0
    %873 = vmatprep.subr.mxu0 0.0
    %874 = vmatpush1.xpose.msra.mxu0 0.0
    %875 = vmatprep.subr.mxu0 0.0
    %876 = vmatpush1.xpose.msra.mxu0 0.0
    %877 = vmatprep.subr.mxu0 0.0
    %878 = vmatpush1.xpose.msra.mxu0 0.0
    %879 = vmatprep.subr.mxu0 0.0
    %880 = vmatpush1.xpose.msra.mxu0 0.0
    %881 = vmatprep.subr.mxu0 0.0
    %882 = vmatpush1.xpose.msra.mxu0 0.0
    %883 = vmatprep.subr.mxu0 0.0
    %884 = vmatpush1.xpose.msra.mxu0 0.0
    %885 = vmatprep.subr.mxu0 0.0
    %886 = vmatpush1.xpose.msra.mxu0 0.0
    %887 = vmatprep.subr.mxu0 0.0
    %888 = vmatpush1.xpose.msra.mxu0 0.0
    %889 = vmatprep.subr.mxu0 0.0
    %890 = vmatpush1.xpose.msra.mxu0 0.0
    %891 = vmatprep.subr.mxu0 0.0
    %892 = vmatpush1.xpose.msra.mxu0 0.0
    %893 = vmatprep.subr.mxu0 0.0
    %894 = vmatpush1.xpose.msra.mxu0 0.0
    %895 = vmatprep.subr.mxu0 0.0
    %896 = vmatpush1.xpose.msra.mxu0 0.0
    %897 = vmatprep.subr.mxu0 0.0
    %898 = vmatpush1.xpose.msra.mxu0 0.0
    %899 = vmatprep.subr.mxu0 0.0
    %900 = vmatpush1.xpose.msra.mxu0 0.0
    %901 = vmatprep.subr.mxu0 0.0
    %902 = vmatpush1.xpose.msra.mxu0 0.0
    %903 = vmatprep.subr.mxu0 0.0
    %904 = vmatpush1.xpose.msra.mxu0 0.0
    %905 = vmatprep.subr.mxu0 0.0
    %906 = vmatpush1.xpose.msra.mxu0 0.0
    %907 = vmatprep.subr.mxu0 0.0
    %908 = vmatpush1.xpose.msra.mxu0 0.0
    %909 = vmatprep.subr.mxu0 0.0
    %910 = vmatpush1.xpose.msra.mxu0 0.0
    %911 = vmatprep.subr.mxu0 0.0
    %912 = vmatpush1.xpose.msra.mxu0 0.0
    %913 = vmatprep.subr.mxu0 0.0
    %914 = vmatpush1.xpose.msra.mxu0 0.0
    %915 = vmatprep.subr.mxu0 0.0
    %916 = vmatpush1.xpose.msra.mxu0 0.0
    %917 = vmatprep.mubr.f32.mxu0 0.0
    %918 = vmatmul.mubr.f32.gmra.mrb[0].mxu0 %v849
    %v919 = vpop.f32.mrb[0].mxu0
    %v920 = vadd.f32 %v847, %v919
    %v921 = vpop.f32.mrb[0].mxu0
    %922 = vdwg.mxu0
    %923 = vrot.lane.b32.xlu0 %v123, 96
    %v924 = vpop.permute.xlu0 %923
    %926 = vrot.lane.b32.xlu0 %v520, 121
    %v927 = vpop.permute.xlu0 %926
    %v929 = vsel %vm152, %v123, 0
    %v931 = vsel %vm152, %v924, 0
    %933 = vmatprep.subr.mxu0 0.0
    %934 = vmatpush1.xpose.msra.mxu0 %v931
    %935 = vmatprep.subr.mxu0 0.0
    %936 = vmatpush1.xpose.msra.mxu0 0.0
    %937 = vmatprep.subr.mxu0 0.0
    %938 = vmatpush1.xpose.msra.mxu0 0.0
    %939 = vmatprep.subr.mxu0 0.0
    %940 = vmatpush1.xpose.msra.mxu0 0.0
    %941 = vmatprep.subr.mxu0 0.0
    %942 = vmatpush1.xpose.msra.mxu0 0.0
    %943 = vmatprep.subr.mxu0 0.0
    %944 = vmatpush1.xpose.msra.mxu0 0.0
    %945 = vmatprep.subr.mxu0 0.0
    %946 = vmatpush1.xpose.msra.mxu0 0.0
    %947 = vmatprep.subr.mxu0 0.0
    %948 = vmatpush1.xpose.msra.mxu0 0.0
    %949 = vmatprep.subr.mxu0 0.0
    %950 = vmatpush1.xpose.msra.mxu0 0.0
    %951 = vmatprep.subr.mxu0 0.0
    %952 = vmatpush1.xpose.msra.mxu0 0.0
    %953 = vmatprep.subr.mxu0 0.0
    %954 = vmatpush1.xpose.msra.mxu0 0.0
    %955 = vmatprep.subr.mxu0 0.0
    %956 = vmatpush1.xpose.msra.mxu0 0.0
    %957 = vmatprep.subr.mxu0 0.0
    %958 = vmatpush1.xpose.msra.mxu0 0.0
    %959 = vmatprep.subr.mxu0 0.0
    %960 = vmatpush1.xpose.msra.mxu0 0.0
    %961 = vmatprep.subr.mxu0 0.0
    %962 = vmatpush1.xpose.msra.mxu0 0.0
    %963 = vmatprep.subr.mxu0 0.0
    %964 = vmatpush1.xpose.msra.mxu0 0.0
    %965 = vmatprep.subr.mxu0 0.0
    %966 = vmatpush1.xpose.msra.mxu0 0.0
    %967 = vmatprep.subr.mxu0 0.0
    %968 = vmatpush1.xpose.msra.mxu0 0.0
    %969 = vmatprep.subr.mxu0 0.0
    %970 = vmatpush1.xpose.msra.mxu0 0.0
    %971 = vmatprep.subr.mxu0 0.0
    %972 = vmatpush1.xpose.msra.mxu0 0.0
    %973 = vmatprep.subr.mxu0 0.0
    %974 = vmatpush1.xpose.msra.mxu0 0.0
    %975 = vmatprep.subr.mxu0 0.0
    %976 = vmatpush1.xpose.msra.mxu0 0.0
    %977 = vmatprep.subr.mxu0 0.0
    %978 = vmatpush1.xpose.msra.mxu0 0.0
    %979 = vmatprep.subr.mxu0 0.0
    %980 = vmatpush1.xpose.msra.mxu0 0.0
    %981 = vmatprep.subr.mxu0 0.0
    %982 = vmatpush1.xpose.msra.mxu0 0.0
    %983 = vmatprep.subr.mxu0 0.0
    %984 = vmatpush1.xpose.msra.mxu0 0.0
    %985 = vmatprep.subr.mxu0 0.0
    %986 = vmatpush1.xpose.msra.mxu0 0.0
    %987 = vmatprep.subr.mxu0 0.0
    %988 = vmatpush1.xpose.msra.mxu0 0.0
    %989 = vmatprep.subr.mxu0 0.0
    %990 = vmatpush1.xpose.msra.mxu0 0.0
    %991 = vmatprep.subr.mxu0 0.0
    %992 = vmatpush1.xpose.msra.mxu0 0.0
    %993 = vmatprep.subr.mxu0 0.0
    %994 = vmatpush1.xpose.msra.mxu0 0.0
    %995 = vmatprep.subr.mxu0 0.0
    %996 = vmatpush1.xpose.msra.mxu0 0.0
    %997 = vmatprep.mubr.f32.mxu0 0.0
    %998 = vmatmul.mubr.f32.gmra.mrb[0].mxu0 %v929
    %v999 = vpop.f32.mrb[0].mxu0
    %v1000 = vadd.f32 %v927, %v999
    %v1001 = vpop.f32.mrb[0].mxu0
    %1002 = vdwg.mxu0
    %1003 = vrot.lane.b32.xlu0 %v125, 96
    %v1004 = vpop.permute.xlu0 %1003
    %1006 = vrot.lane.b32.xlu0 %v521, 121
    %v1007 = vpop.permute.xlu0 %1006
    %v1009 = vsel %vm152, %v125, 0
    %v1011 = vsel %vm152, %v1004, 0
    %1013 = vmatprep.subr.mxu0 0.0
    %1014 = vmatpush1.xpose.msra.mxu0 %v1011
    %1015 = vmatprep.subr.mxu0 0.0
    %1016 = vmatpush1.xpose.msra.mxu0 0.0
    %1017 = vmatprep.subr.mxu0 0.0
    %1018 = vmatpush1.xpose.msra.mxu0 0.0
    %1019 = vmatprep.subr.mxu0 0.0
    %1020 = vmatpush1.xpose.msra.mxu0 0.0
    %1021 = vmatprep.subr.mxu0 0.0
    %1022 = vmatpush1.xpose.msra.mxu0 0.0
    %1023 = vmatprep.subr.mxu0 0.0
    %1024 = vmatpush1.xpose.msra.mxu0 0.0
    %1025 = vmatprep.subr.mxu0 0.0
    %1026 = vmatpush1.xpose.msra.mxu0 0.0
    %1027 = vmatprep.subr.mxu0 0.0
    %1028 = vmatpush1.xpose.msra.mxu0 0.0
    %1029 = vmatprep.subr.mxu0 0.0
    %1030 = vmatpush1.xpose.msra.mxu0 0.0
    %1031 = vmatprep.subr.mxu0 0.0
    %1032 = vmatpush1.xpose.msra.mxu0 0.0
    %1033 = vmatprep.subr.mxu0 0.0
    %1034 = vmatpush1.xpose.msra.mxu0 0.0
    %1035 = vmatprep.subr.mxu0 0.0
    %1036 = vmatpush1.xpose.msra.mxu0 0.0
    %1037 = vmatprep.subr.mxu0 0.0
    %1038 = vmatpush1.xpose.msra.mxu0 0.0
    %1039 = vmatprep.subr.mxu0 0.0
    %1040 = vmatpush1.xpose.msra.mxu0 0.0
    %1041 = vmatprep.subr.mxu0 0.0
    %1042 = vmatpush1.xpose.msra.mxu0 0.0
    %1043 = vmatprep.subr.mxu0 0.0
    %1044 = vmatpush1.xpose.msra.mxu0 0.0
    %1045 = vmatprep.subr.mxu0 0.0
    %1046 = vmatpush1.xpose.msra.mxu0 0.0
    %1047 = vmatprep.subr.mxu0 0.0
    %1048 = vmatpush1.xpose.msra.mxu0 0.0
    %1049 = vmatprep.subr.mxu0 0.0
    %1050 = vmatpush1.xpose.msra.mxu0 0.0
    %1051 = vmatprep.subr.mxu0 0.0
    %1052 = vmatpush1.xpose.msra.mxu0 0.0
    %1053 = vmatprep.subr.mxu0 0.0
    %1054 = vmatpush1.xpose.msra.mxu0 0.0
    %1055 = vmatprep.subr.mxu0 0.0
    %1056 = vmatpush1.xpose.msra.mxu0 0.0
    %1057 = vmatprep.subr.mxu0 0.0
    %1058 = vmatpush1.xpose.msra.mxu0 0.0
    %1059 = vmatprep.subr.mxu0 0.0
    %1060 = vmatpush1.xpose.msra.mxu0 0.0
    %1061 = vmatprep.subr.mxu0 0.0
    %1062 = vmatpush1.xpose.msra.mxu0 0.0
    %1063 = vmatprep.subr.mxu0 0.0
    %1064 = vmatpush1.xpose.msra.mxu0 0.0
    %1065 = vmatprep.subr.mxu0 0.0
    %1066 = vmatpush1.xpose.msra.mxu0 0.0
    %1067 = vmatprep.subr.mxu0 0.0
    %1068 = vmatpush1.xpose.msra.mxu0 0.0
    %1069 = vmatprep.subr.mxu0 0.0
    %1070 = vmatpush1.xpose.msra.mxu0 0.0
    %1071 = vmatprep.subr.mxu0 0.0
    %1072 = vmatpush1.xpose.msra.mxu0 0.0
    %1073 = vmatprep.subr.mxu0 0.0
    %1074 = vmatpush1.xpose.msra.mxu0 0.0
    %1075 = vmatprep.subr.mxu0 0.0
    %1076 = vmatpush1.xpose.msra.mxu0 0.0
    %1077 = vmatprep.mubr.f32.mxu0 0.0
    %1078 = vmatmul.mubr.f32.gmra.mrb[0].mxu0 %v1009
    %v1079 = vpop.f32.mrb[0].mxu0
    %v1080 = vadd.f32 %v1007, %v1079
    %v1081 = vpop.f32.mrb[0].mxu0
    %1082 = vdwg.mxu0
    %1083 = vrot.lane.b32.xlu0 %v127, 96
    %v1084 = vpop.permute.xlu0 %1083
    %1086 = vrot.lane.b32.xlu0 %v522, 121
    %v1087 = vpop.permute.xlu0 %1086
    %v1089 = vsel %vm152, %v127, 0
    %v1091 = vsel %vm152, %v1084, 0
    %1093 = vmatprep.subr.mxu0 0.0
    %1094 = vmatpush1.xpose.msra.mxu0 %v1091
    %1095 = vmatprep.subr.mxu0 0.0
    %1096 = vmatpush1.xpose.msra.mxu0 0.0
    %1097 = vmatprep.subr.mxu0 0.0
    %1098 = vmatpush1.xpose.msra.mxu0 0.0
    %1099 = vmatprep.subr.mxu0 0.0
    %1100 = vmatpush1.xpose.msra.mxu0 0.0
    %1101 = vmatprep.subr.mxu0 0.0
    %1102 = vmatpush1.xpose.msra.mxu0 0.0
    %1103 = vmatprep.subr.mxu0 0.0
    %1104 = vmatpush1.xpose.msra.mxu0 0.0
    %1105 = vmatprep.subr.mxu0 0.0
    %1106 = vmatpush1.xpose.msra.mxu0 0.0
    %1107 = vmatprep.subr.mxu0 0.0
    %1108 = vmatpush1.xpose.msra.mxu0 0.0
    %1109 = vmatprep.subr.mxu0 0.0
    %1110 = vmatpush1.xpose.msra.mxu0 0.0
    %1111 = vmatprep.subr.mxu0 0.0
    %1112 = vmatpush1.xpose.msra.mxu0 0.0
    %1113 = vmatprep.subr.mxu0 0.0
    %1114 = vmatpush1.xpose.msra.mxu0 0.0
    %1115 = vmatprep.subr.mxu0 0.0
    %1116 = vmatpush1.xpose.msra.mxu0 0.0
    %1117 = vmatprep.subr.mxu0 0.0
    %1118 = vmatpush1.xpose.msra.mxu0 0.0
    %1119 = vmatprep.subr.mxu0 0.0
    %1120 = vmatpush1.xpose.msra.mxu0 0.0
    %1121 = vmatprep.subr.mxu0 0.0
    %1122 = vmatpush1.xpose.msra.mxu0 0.0
    %1123 = vmatprep.subr.mxu0 0.0
    %1124 = vmatpush1.xpose.msra.mxu0 0.0
    %1125 = vmatprep.subr.mxu0 0.0
    %1126 = vmatpush1.xpose.msra.mxu0 0.0
    %1127 = vmatprep.subr.mxu0 0.0
    %1128 = vmatpush1.xpose.msra.mxu0 0.0
    %1129 = vmatprep.subr.mxu0 0.0
    %1130 = vmatpush1.xpose.msra.mxu0 0.0
    %1131 = vmatprep.subr.mxu0 0.0
    %1132 = vmatpush1.xpose.msra.mxu0 0.0
    %1133 = vmatprep.subr.mxu0 0.0
    %1134 = vmatpush1.xpose.msra.mxu0 0.0
    %1135 = vmatprep.subr.mxu0 0.0
    %1136 = vmatpush1.xpose.msra.mxu0 0.0
    %1137 = vmatprep.subr.mxu0 0.0
    %1138 = vmatpush1.xpose.msra.mxu0 0.0
    %1139 = vmatprep.subr.mxu0 0.0
    %1140 = vmatpush1.xpose.msra.mxu0 0.0
    %1141 = vmatprep.subr.mxu0 0.0
    %1142 = vmatpush1.xpose.msra.mxu0 0.0
    %1143 = vmatprep.subr.mxu0 0.0
    %1144 = vmatpush1.xpose.msra.mxu0 0.0
    %1145 = vmatprep.subr.mxu0 0.0
    %1146 = vmatpush1.xpose.msra.mxu0 0.0
    %1147 = vmatprep.subr.mxu0 0.0
    %1148 = vmatpush1.xpose.msra.mxu0 0.0
    %1149 = vmatprep.subr.mxu0 0.0
    %1150 = vmatpush1.xpose.msra.mxu0 0.0
    %1151 = vmatprep.subr.mxu0 0.0
    %1152 = vmatpush1.xpose.msra.mxu0 0.0
    %1153 = vmatprep.subr.mxu0 0.0
    %1154 = vmatpush1.xpose.msra.mxu0 0.0
    %1155 = vmatprep.subr.mxu0 0.0
    %1156 = vmatpush1.xpose.msra.mxu0 0.0
    %1157 = vmatprep.mubr.f32.mxu0 0.0
    %1158 = vmatmul.mubr.f32.gmra.mrb[0].mxu0 %v1089
    %v1159 = vpop.f32.mrb[0].mxu0
    %v1160 = vadd.f32 %v1087, %v1159
    %v1161 = vpop.f32.mrb[0].mxu0
    %1162 = vdwg.mxu0
    %v1163 = vsel %vm152, %v600, -inf
    %1164 = vmax.xlane.f32.xlu0 %v1163
    %v1165 = vpop.xlane.xlu0 %1164
    %v1166 = vsel %vm152, %v680, -inf
    %1167 = vmax.xlane.f32.xlu0 %v1166
    %v1168 = vpop.xlane.xlu0 %1167
    %v1169 = vsel %vm152, %v760, -inf
    %1170 = vmax.xlane.f32.xlu0 %v1169
    %v1171 = vpop.xlane.xlu0 %1170
    %v1172 = vsel %vm152, %v840, -inf
    %1173 = vmax.xlane.f32.xlu0 %v1172
    %v1174 = vpop.xlane.xlu0 %1173
    %v1175 = vsel %vm152, %v920, -inf
    %1176 = vmax.xlane.f32.xlu0 %v1175
    %v1177 = vpop.xlane.xlu0 %1176
    %v1178 = vsel %vm152, %v1000, -inf
    %1179 = vmax.xlane.f32.xlu0 %v1178
    %v1180 = vpop.xlane.xlu0 %1179
    %v1181 = vsel %vm152, %v1080, -inf
    %1182 = vmax.xlane.f32.xlu0 %v1181
    %v1183 = vpop.xlane.xlu0 %1182
    %v1184 = vsel %vm152, %v1160, -inf
    %1185 = vmax.xlane.f32.xlu0 %v1184
    %v1186 = vpop.xlane.xlu0 %1185
    %v1187 = vsub.f32 %v600, %v1165
    %v1188 = vsub.f32 %v680, %v1168
    %v1189 = vsub.f32 %v760, %v1171
    %v1190 = vsub.f32 %v840, %v1174
    %v1191 = vsub.f32 %v920, %v1177
    %v1192 = vsub.f32 %v1000, %v1180
    %v1193 = vsub.f32 %v1080, %v1183
    %v1194 = vsub.f32 %v1160, %v1186
    %v1195 = vmul.f32 %v1187, 1.442695
    %v1196 = vpow.pop %v1195
    %v1197 = vmul.f32 %v1188, 1.442695
    %v1198 = vpow.pop %v1197
    %v1199 = vmul.f32 %v1189, 1.442695
    %v1200 = vpow.pop %v1199
    %v1201 = vmul.f32 %v1190, 1.442695
    %v1202 = vpow.pop %v1201
    %v1203 = vmul.f32 %v1191, 1.442695
    %v1204 = vpow.pop %v1203
    %v1205 = vmul.f32 %v1192, 1.442695
    %v1206 = vpow.pop %v1205
    %v1207 = vmul.f32 %v1193, 1.442695
    %v1208 = vpow.pop %v1207
    %v1209 = vmul.f32 %v1194, 1.442695
    %v1210 = vpow.pop %v1209
    %v1211 = vsel %vm152, %v1196, 0.0
    %1212 = vadd.xlane.f32.xlu0 %v1211
    %v1213 = vpop.xlane.xlu0 %1212
    %v1214 = vsel %vm152, %v1198, 0.0
    %1215 = vadd.xlane.f32.xlu0 %v1214
    %v1216 = vpop.xlane.xlu0 %1215
    %v1217 = vsel %vm152, %v1200, 0.0
    %1218 = vadd.xlane.f32.xlu0 %v1217
    %v1219 = vpop.xlane.xlu0 %1218
    %v1220 = vsel %vm152, %v1202, 0.0
    %1221 = vadd.xlane.f32.xlu0 %v1220
    %v1222 = vpop.xlane.xlu0 %1221
    %v1223 = vsel %vm152, %v1204, 0.0
    %1224 = vadd.xlane.f32.xlu0 %v1223
    %v1225 = vpop.xlane.xlu0 %1224
    %v1226 = vsel %vm152, %v1206, 0.0
    %1227 = vadd.xlane.f32.xlu0 %v1226
    %v1228 = vpop.xlane.xlu0 %1227
    %v1229 = vsel %vm152, %v1208, 0.0
    %1230 = vadd.xlane.f32.xlu0 %v1229
    %v1231 = vpop.xlane.xlu0 %1230
    %v1232 = vsel %vm152, %v1210, 0.0
    %1233 = vadd.xlane.f32.xlu0 %v1232
    %v1234 = vpop.xlane.xlu0 %1233
    %v1235 = vrcp.pop %v1213
    %v1236 = vmul.f32 %v1196, %v1235
    %v1237 = vrcp.pop %v1216
    %v1238 = vmul.f32 %v1198, %v1237
    %v1239 = vrcp.pop %v1219
    %v1240 = vmul.f32 %v1200, %v1239
    %v1241 = vrcp.pop %v1222
    %v1242 = vmul.f32 %v1202, %v1241
    %v1243 = vrcp.pop %v1225
    %v1244 = vmul.f32 %v1204, %v1243
    %v1245 = vrcp.pop %v1228
    %v1246 = vmul.f32 %v1206, %v1245
    %v1247 = vrcp.pop %v1231
    %v1248 = vmul.f32 %v1208, %v1247
    %v1249 = vrcp.pop %v1234
    %v1250 = vmul.f32 %v1210, %v1249
    %1251 = vrot.lane.b32.xlu0 %v106, 64
    %v1252 = vpop.permute.xlu0 %1251
    %v1255 = vsel %vm152, %v1236, 0
    %1257 = vmatprep.subr.mxu0 0.0
    %1258 = vmatpush1.msra.mxu0 %v1252
    %1259 = vmatprep.subr.mxu0 0.0
    %1260 = vmatpush1.msra.mxu0 0.0
    %1261 = vmatprep.subr.mxu0 0.0
    %1262 = vmatpush1.msra.mxu0 0.0
    %1263 = vmatprep.subr.mxu0 0.0
    %1264 = vmatpush1.msra.mxu0 0.0
    %1265 = vmatprep.subr.mxu0 0.0
    %1266 = vmatpush1.msra.mxu0 0.0
    %1267 = vmatprep.subr.mxu0 0.0
    %1268 = vmatpush1.msra.mxu0 0.0
    %1269 = vmatprep.subr.mxu0 0.0
    %1270 = vmatpush1.msra.mxu0 0.0
    %1271 = vmatprep.subr.mxu0 0.0
    %1272 = vmatpush1.msra.mxu0 0.0
    %1273 = vmatprep.subr.mxu0 0.0
    %1274 = vmatpush1.msra.mxu0 0.0
    %1275 = vmatprep.subr.mxu0 0.0
    %1276 = vmatpush1.msra.mxu0 0.0
    %1277 = vmatprep.subr.mxu0 0.0
    %1278 = vmatpush1.msra.mxu0 0.0
    %1279 = vmatprep.subr.mxu0 0.0
    %1280 = vmatpush1.msra.mxu0 0.0
    %1281 = vmatprep.subr.mxu0 0.0
    %1282 = vmatpush1.msra.mxu0 0.0
    %1283 = vmatprep.subr.mxu0 0.0
    %1284 = vmatpush1.msra.mxu0 0.0
    %1285 = vmatprep.subr.mxu0 0.0
    %1286 = vmatpush1.msra.mxu0 0.0
    %1287 = vmatprep.subr.mxu0 0.0
    %1288 = vmatpush1.msra.mxu0 0.0
    %1289 = vmatprep.subr.mxu0 0.0
    %1290 = vmatpush1.msra.mxu0 0.0
    %1291 = vmatprep.subr.mxu0 0.0
    %1292 = vmatpush1.msra.mxu0 0.0
    %1293 = vmatprep.subr.mxu0 0.0
    %1294 = vmatpush1.msra.mxu0 0.0
    %1295 = vmatprep.subr.mxu0 0.0
    %1296 = vmatpush1.msra.mxu0 0.0
    %1297 = vmatprep.subr.mxu0 0.0
    %1298 = vmatpush1.msra.mxu0 0.0
    %1299 = vmatprep.subr.mxu0 0.0
    %1300 = vmatpush1.msra.mxu0 0.0
    %1301 = vmatprep.subr.mxu0 0.0
    %1302 = vmatpush1.msra.mxu0 0.0
    %1303 = vmatprep.subr.mxu0 0.0
    %1304 = vmatpush1.msra.mxu0 0.0
    %1305 = vmatprep.subr.mxu0 0.0
    %1306 = vmatpush1.msra.mxu0 0.0
    %1307 = vmatprep.subr.mxu0 0.0
    %1308 = vmatpush1.msra.mxu0 0.0
    %1309 = vmatprep.subr.mxu0 0.0
    %1310 = vmatpush1.msra.mxu0 0.0
    %1311 = vmatprep.subr.mxu0 0.0
    %1312 = vmatpush1.msra.mxu0 0.0
    %1313 = vmatprep.subr.mxu0 0.0
    %1314 = vmatpush1.msra.mxu0 0.0
    %1315 = vmatprep.subr.mxu0 0.0
    %1316 = vmatpush1.msra.mxu0 0.0
    %1317 = vmatprep.subr.mxu0 0.0
    %1318 = vmatpush1.msra.mxu0 0.0
    %1319 = vmatprep.subr.mxu0 0.0
    %1320 = vmatpush1.msra.mxu0 0.0
    %1321 = vmatprep.mubr.f32.mxu0 0.0
    %1322 = vmatmul.mubr.f32.gmra.mrb[0].mxu0 %v1255
    %v1323 = vpop.f32.mrb[0].mxu0
    %v1324 = vadd.f32 0.0, %v1323
    %v1325 = vpop.f32.mrb[0].mxu0
    %1326 = vdwg.mxu0
    %1327 = vrot.lane.b32.xlu0 %v111, 64
    %v1328 = vpop.permute.xlu0 %1327
    %v1331 = vsel %vm152, %v1238, 0
    %1333 = vmatprep.subr.mxu0 0.0
    %1334 = vmatpush1.msra.mxu0 %v1328
    %1335 = vmatprep.subr.mxu0 0.0
    %1336 = vmatpush1.msra.mxu0 0.0
    %1337 = vmatprep.subr.mxu0 0.0
    %1338 = vmatpush1.msra.mxu0 0.0
    %1339 = vmatprep.subr.mxu0 0.0
    %1340 = vmatpush1.msra.mxu0 0.0
    %1341 = vmatprep.subr.mxu0 0.0
    %1342 = vmatpush1.msra.mxu0 0.0
    %1343 = vmatprep.subr.mxu0 0.0
    %1344 = vmatpush1.msra.mxu0 0.0
    %1345 = vmatprep.subr.mxu0 0.0
    %1346 = vmatpush1.msra.mxu0 0.0
    %1347 = vmatprep.subr.mxu0 0.0
    %1348 = vmatpush1.msra.mxu0 0.0
    %1349 = vmatprep.subr.mxu0 0.0
    %1350 = vmatpush1.msra.mxu0 0.0
    %1351 = vmatprep.subr.mxu0 0.0
    %1352 = vmatpush1.msra.mxu0 0.0
    %1353 = vmatprep.subr.mxu0 0.0
    %1354 = vmatpush1.msra.mxu0 0.0
    %1355 = vmatprep.subr.mxu0 0.0
    %1356 = vmatpush1.msra.mxu0 0.0
    %1357 = vmatprep.subr.mxu0 0.0
    %1358 = vmatpush1.msra.mxu0 0.0
    %1359 = vmatprep.subr.mxu0 0.0
    %1360 = vmatpush1.msra.mxu0 0.0
    %1361 = vmatprep.subr.mxu0 0.0
    %1362 = vmatpush1.msra.mxu0 0.0
    %1363 = vmatprep.subr.mxu0 0.0
    %1364 = vmatpush1.msra.mxu0 0.0
    %1365 = vmatprep.subr.mxu0 0.0
    %1366 = vmatpush1.msra.mxu0 0.0
    %1367 = vmatprep.subr.mxu0 0.0
    %1368 = vmatpush1.msra.mxu0 0.0
    %1369 = vmatprep.subr.mxu0 0.0
    %1370 = vmatpush1.msra.mxu0 0.0
    %1371 = vmatprep.subr.mxu0 0.0
    %1372 = vmatpush1.msra.mxu0 0.0
    %1373 = vmatprep.subr.mxu0 0.0
    %1374 = vmatpush1.msra.mxu0 0.0
    %1375 = vmatprep.subr.mxu0 0.0
    %1376 = vmatpush1.msra.mxu0 0.0
    %1377 = vmatprep.subr.mxu0 0.0
    %1378 = vmatpush1.msra.mxu0 0.0
    %1379 = vmatprep.subr.mxu0 0.0
    %1380 = vmatpush1.msra.mxu0 0.0
    %1381 = vmatprep.subr.mxu0 0.0
    %1382 = vmatpush1.msra.mxu0 0.0
    %1383 = vmatprep.subr.mxu0 0.0
    %1384 = vmatpush1.msra.mxu0 0.0
    %1385 = vmatprep.subr.mxu0 0.0
    %1386 = vmatpush1.msra.mxu0 0.0
    %1387 = vmatprep.subr.mxu0 0.0
    %1388 = vmatpush1.msra.mxu0 0.0
    %1389 = vmatprep.subr.mxu0 0.0
    %1390 = vmatpush1.msra.mxu0 0.0
    %1391 = vmatprep.subr.mxu0 0.0
    %1392 = vmatpush1.msra.mxu0 0.0
    %1393 = vmatprep.subr.mxu0 0.0
    %1394 = vmatpush1.msra.mxu0 0.0
    %1395 = vmatprep.subr.mxu0 0.0
    %1396 = vmatpush1.msra.mxu0 0.0
    %1397 = vmatprep.mubr.f32.mxu0 0.0
    %1398 = vmatmul.mubr.f32.gmra.mrb[0].mxu0 %v1331
    %v1399 = vpop.f32.mrb[0].mxu0
    %v1400 = vadd.f32 0.0, %v1399
    %v1401 = vpop.f32.mrb[0].mxu0
    %1402 = vdwg.mxu0
    %1403 = vrot.lane.b32.xlu0 %v117, 64
    %v1404 = vpop.permute.xlu0 %1403
    %v1407 = vsel %vm152, %v1240, 0
    %1409 = vmatprep.subr.mxu0 0.0
    %1410 = vmatpush1.msra.mxu0 %v1404
    %1411 = vmatprep.subr.mxu0 0.0
    %1412 = vmatpush1.msra.mxu0 0.0
    %1413 = vmatprep.subr.mxu0 0.0
    %1414 = vmatpush1.msra.mxu0 0.0
    %1415 = vmatprep.subr.mxu0 0.0
    %1416 = vmatpush1.msra.mxu0 0.0
    %1417 = vmatprep.subr.mxu0 0.0
    %1418 = vmatpush1.msra.mxu0 0.0
    %1419 = vmatprep.subr.mxu0 0.0
    %1420 = vmatpush1.msra.mxu0 0.0
    %1421 = vmatprep.subr.mxu0 0.0
    %1422 = vmatpush1.msra.mxu0 0.0
    %1423 = vmatprep.subr.mxu0 0.0
    %1424 = vmatpush1.msra.mxu0 0.0
    %1425 = vmatprep.subr.mxu0 0.0
    %1426 = vmatpush1.msra.mxu0 0.0
    %1427 = vmatprep.subr.mxu0 0.0
    %1428 = vmatpush1.msra.mxu0 0.0
    %1429 = vmatprep.subr.mxu0 0.0
    %1430 = vmatpush1.msra.mxu0 0.0
    %1431 = vmatprep.subr.mxu0 0.0
    %1432 = vmatpush1.msra.mxu0 0.0
    %1433 = vmatprep.subr.mxu0 0.0
    %1434 = vmatpush1.msra.mxu0 0.0
    %1435 = vmatprep.subr.mxu0 0.0
    %1436 = vmatpush1.msra.mxu0 0.0
    %1437 = vmatprep.subr.mxu0 0.0
    %1438 = vmatpush1.msra.mxu0 0.0
    %1439 = vmatprep.subr.mxu0 0.0
    %1440 = vmatpush1.msra.mxu0 0.0
    %1441 = vmatprep.subr.mxu0 0.0
    %1442 = vmatpush1.msra.mxu0 0.0
    %1443 = vmatprep.subr.mxu0 0.0
    %1444 = vmatpush1.msra.mxu0 0.0
    %1445 = vmatprep.subr.mxu0 0.0
    %1446 = vmatpush1.msra.mxu0 0.0
    %1447 = vmatprep.subr.mxu0 0.0
    %1448 = vmatpush1.msra.mxu0 0.0
    %1449 = vmatprep.subr.mxu0 0.0
    %1450 = vmatpush1.msra.mxu0 0.0
    %1451 = vmatprep.subr.mxu0 0.0
    %1452 = vmatpush1.msra.mxu0 0.0
    %1453 = vmatprep.subr.mxu0 0.0
    %1454 = vmatpush1.msra.mxu0 0.0
    %1455 = vmatprep.subr.mxu0 0.0
    %1456 = vmatpush1.msra.mxu0 0.0
    %1457 = vmatprep.subr.mxu0 0.0
    %1458 = vmatpush1.msra.mxu0 0.0
    %1459 = vmatprep.subr.mxu0 0.0
    %1460 = vmatpush1.msra.mxu0 0.0
    %1461 = vmatprep.subr.mxu0 0.0
    %1462 = vmatpush1.msra.mxu0 0.0
    %1463 = vmatprep.subr.mxu0 0.0
    %1464 = vmatpush1.msra.mxu0 0.0
    %1465 = vmatprep.subr.mxu0 0.0
    %1466 = vmatpush1.msra.mxu0 0.0
    %1467 = vmatprep.subr.mxu0 0.0
    %1468 = vmatpush1.msra.mxu0 0.0
    %1469 = vmatprep.subr.mxu0 0.0
    %1470 = vmatpush1.msra.mxu0 0.0
    %1471 = vmatprep.subr.mxu0 0.0
    %1472 = vmatpush1.msra.mxu0 0.0
    %1473 = vmatprep.mubr.f32.mxu0 0.0
    %1474 = vmatmul.mubr.f32.gmra.mrb[0].mxu0 %v1407
    %v1475 = vpop.f32.mrb[0].mxu0
    %v1476 = vadd.f32 0.0, %v1475
    %v1477 = vpop.f32.mrb[0].mxu0
    %1478 = vdwg.mxu0
    %1479 = vrot.lane.b32.xlu0 %v119, 64
    %v1480 = vpop.permute.xlu0 %1479
    %v1483 = vsel %vm152, %v1242, 0
    %1485 = vmatprep.subr.mxu0 0.0
    %1486 = vmatpush1.msra.mxu0 %v1480
    %1487 = vmatprep.subr.mxu0 0.0
    %1488 = vmatpush1.msra.mxu0 0.0
    %1489 = vmatprep.subr.mxu0 0.0
    %1490 = vmatpush1.msra.mxu0 0.0
    %1491 = vmatprep.subr.mxu0 0.0
    %1492 = vmatpush1.msra.mxu0 0.0
    %1493 = vmatprep.subr.mxu0 0.0
    %1494 = vmatpush1.msra.mxu0 0.0
    %1495 = vmatprep.subr.mxu0 0.0
    %1496 = vmatpush1.msra.mxu0 0.0
    %1497 = vmatprep.subr.mxu0 0.0
    %1498 = vmatpush1.msra.mxu0 0.0
    %1499 = vmatprep.subr.mxu0 0.0
    %1500 = vmatpush1.msra.mxu0 0.0
    %1501 = vmatprep.subr.mxu0 0.0
    %1502 = vmatpush1.msra.mxu0 0.0
    %1503 = vmatprep.subr.mxu0 0.0
    %1504 = vmatpush1.msra.mxu0 0.0
    %1505 = vmatprep.subr.mxu0 0.0
    %1506 = vmatpush1.msra.mxu0 0.0
    %1507 = vmatprep.subr.mxu0 0.0
    %1508 = vmatpush1.msra.mxu0 0.0
    %1509 = vmatprep.subr.mxu0 0.0
    %1510 = vmatpush1.msra.mxu0 0.0
    %1511 = vmatprep.subr.mxu0 0.0
    %1512 = vmatpush1.msra.mxu0 0.0
    %1513 = vmatprep.subr.mxu0 0.0
    %1514 = vmatpush1.msra.mxu0 0.0
    %1515 = vmatprep.subr.mxu0 0.0
    %1516 = vmatpush1.msra.mxu0 0.0
    %1517 = vmatprep.subr.mxu0 0.0
    %1518 = vmatpush1.msra.mxu0 0.0
    %1519 = vmatprep.subr.mxu0 0.0
    %1520 = vmatpush1.msra.mxu0 0.0
    %1521 = vmatprep.subr.mxu0 0.0
    %1522 = vmatpush1.msra.mxu0 0.0
    %1523 = vmatprep.subr.mxu0 0.0
    %1524 = vmatpush1.msra.mxu0 0.0
    %1525 = vmatprep.subr.mxu0 0.0
    %1526 = vmatpush1.msra.mxu0 0.0
    %1527 = vmatprep.subr.mxu0 0.0
    %1528 = vmatpush1.msra.mxu0 0.0
    %1529 = vmatprep.subr.mxu0 0.0
    %1530 = vmatpush1.msra.mxu0 0.0
    %1531 = vmatprep.subr.mxu0 0.0
    %1532 = vmatpush1.msra.mxu0 0.0
    %1533 = vmatprep.subr.mxu0 0.0
    %1534 = vmatpush1.msra.mxu0 0.0
    %1535 = vmatprep.subr.mxu0 0.0
    %1536 = vmatpush1.msra.mxu0 0.0
    %1537 = vmatprep.subr.mxu0 0.0
    %1538 = vmatpush1.msra.mxu0 0.0
    %1539 = vmatprep.subr.mxu0 0.0
    %1540 = vmatpush1.msra.mxu0 0.0
    %1541 = vmatprep.subr.mxu0 0.0
    %1542 = vmatpush1.msra.mxu0 0.0
    %1543 = vmatprep.subr.mxu0 0.0
    %1544 = vmatpush1.msra.mxu0 0.0
    %1545 = vmatprep.subr.mxu0 0.0
    %1546 = vmatpush1.msra.mxu0 0.0
    %1547 = vmatprep.subr.mxu0 0.0
    %1548 = vmatpush1.msra.mxu0 0.0
    %1549 = vmatprep.mubr.f32.mxu0 0.0
    %1550 = vmatmul.mubr.f32.gmra.mrb[0].mxu0 %v1483
    %v1551 = vpop.f32.mrb[0].mxu0
    %v1552 = vadd.f32 0.0, %v1551
    %v1553 = vpop.f32.mrb[0].mxu0
    %1554 = vdwg.mxu0
    %1555 = vrot.lane.b32.xlu0 %v121, 64
    %v1556 = vpop.permute.xlu0 %1555
    %v1559 = vsel %vm152, %v1244, 0
    %1561 = vmatprep.subr.mxu0 0.0
    %1562 = vmatpush1.msra.mxu0 %v1556
    %1563 = vmatprep.subr.mxu0 0.0
    %1564 = vmatpush1.msra.mxu0 0.0
    %1565 = vmatprep.subr.mxu0 0.0
    %1566 = vmatpush1.msra.mxu0 0.0
    %1567 = vmatprep.subr.mxu0 0.0
    %1568 = vmatpush1.msra.mxu0 0.0
    %1569 = vmatprep.subr.mxu0 0.0
    %1570 = vmatpush1.msra.mxu0 0.0
    %1571 = vmatprep.subr.mxu0 0.0
    %1572 = vmatpush1.msra.mxu0 0.0
    %1573 = vmatprep.subr.mxu0 0.0
    %1574 = vmatpush1.msra.mxu0 0.0
    %1575 = vmatprep.subr.mxu0 0.0
    %1576 = vmatpush1.msra.mxu0 0.0
    %1577 = vmatprep.subr.mxu0 0.0
    %1578 = vmatpush1.msra.mxu0 0.0
    %1579 = vmatprep.subr.mxu0 0.0
    %1580 = vmatpush1.msra.mxu0 0.0
    %1581 = vmatprep.subr.mxu0 0.0
    %1582 = vmatpush1.msra.mxu0 0.0
    %1583 = vmatprep.subr.mxu0 0.0
    %1584 = vmatpush1.msra.mxu0 0.0
    %1585 = vmatprep.subr.mxu0 0.0
    %1586 = vmatpush1.msra.mxu0 0.0
    %1587 = vmatprep.subr.mxu0 0.0
    %1588 = vmatpush1.msra.mxu0 0.0
    %1589 = vmatprep.subr.mxu0 0.0
    %1590 = vmatpush1.msra.mxu0 0.0
    %1591 = vmatprep.subr.mxu0 0.0
    %1592 = vmatpush1.msra.mxu0 0.0
    %1593 = vmatprep.subr.mxu0 0.0
    %1594 = vmatpush1.msra.mxu0 0.0
    %1595 = vmatprep.subr.mxu0 0.0
    %1596 = vmatpush1.msra.mxu0 0.0
    %1597 = vmatprep.subr.mxu0 0.0
    %1598 = vmatpush1.msra.mxu0 0.0
    %1599 = vmatprep.subr.mxu0 0.0
    %1600 = vmatpush1.msra.mxu0 0.0
    %1601 = vmatprep.subr.mxu0 0.0
    %1602 = vmatpush1.msra.mxu0 0.0
    %1603 = vmatprep.subr.mxu0 0.0
    %1604 = vmatpush1.msra.mxu0 0.0
    %1605 = vmatprep.subr.mxu0 0.0
    %1606 = vmatpush1.msra.mxu0 0.0
    %1607 = vmatprep.subr.mxu0 0.0
    %1608 = vmatpush1.msra.mxu0 0.0
    %1609 = vmatprep.subr.mxu0 0.0
    %1610 = vmatpush1.msra.mxu0 0.0
    %1611 = vmatprep.subr.mxu0 0.0
    %1612 = vmatpush1.msra.mxu0 0.0
    %1613 = vmatprep.subr.mxu0 0.0
    %1614 = vmatpush1.msra.mxu0 0.0
    %1615 = vmatprep.subr.mxu0 0.0
    %1616 = vmatpush1.msra.mxu0 0.0
    %1617 = vmatprep.subr.mxu0 0.0
    %1618 = vmatpush1.msra.mxu0 0.0
    %1619 = vmatprep.subr.mxu0 0.0
    %1620 = vmatpush1.msra.mxu0 0.0
    %1621 = vmatprep.subr.mxu0 0.0
    %1622 = vmatpush1.msra.mxu0 0.0
    %1623 = vmatprep.subr.mxu0 0.0
    %1624 = vmatpush1.msra.mxu0 0.0
    %1625 = vmatprep.mubr.f32.mxu0 0.0
    %1626 = vmatmul.mubr.f32.gmra.mrb[0].mxu0 %v1559
    %v1627 = vpop.f32.mrb[0].mxu0
    %v1628 = vadd.f32 0.0, %v1627
    %v1629 = vpop.f32.mrb[0].mxu0
    %1630 = vdwg.mxu0
    %1631 = vrot.lane.b32.xlu0 %v123, 64
    %v1632 = vpop.permute.xlu0 %1631
    %v1635 = vsel %vm152, %v1246, 0
    %1637 = vmatprep.subr.mxu0 0.0
    %1638 = vmatpush1.msra.mxu0 %v1632
    %1639 = vmatprep.subr.mxu0 0.0
    %1640 = vmatpush1.msra.mxu0 0.0
    %1641 = vmatprep.subr.mxu0 0.0
    %1642 = vmatpush1.msra.mxu0 0.0
    %1643 = vmatprep.subr.mxu0 0.0
    %1644 = vmatpush1.msra.mxu0 0.0
    %1645 = vmatprep.subr.mxu0 0.0
    %1646 = vmatpush1.msra.mxu0 0.0
    %1647 = vmatprep.subr.mxu0 0.0
    %1648 = vmatpush1.msra.mxu0 0.0
    %1649 = vmatprep.subr.mxu0 0.0
    %1650 = vmatpush1.msra.mxu0 0.0
    %1651 = vmatprep.subr.mxu0 0.0
    %1652 = vmatpush1.msra.mxu0 0.0
    %1653 = vmatprep.subr.mxu0 0.0
    %1654 = vmatpush1.msra.mxu0 0.0
    %1655 = vmatprep.subr.mxu0 0.0
    %1656 = vmatpush1.msra.mxu0 0.0
    %1657 = vmatprep.subr.mxu0 0.0
    %1658 = vmatpush1.msra.mxu0 0.0
    %1659 = vmatprep.subr.mxu0 0.0
    %1660 = vmatpush1.msra.mxu0 0.0
    %1661 = vmatprep.subr.mxu0 0.0
    %1662 = vmatpush1.msra.mxu0 0.0
    %1663 = vmatprep.subr.mxu0 0.0
    %1664 = vmatpush1.msra.mxu0 0.0
    %1665 = vmatprep.subr.mxu0 0.0
    %1666 = vmatpush1.msra.mxu0 0.0
    %1667 = vmatprep.subr.mxu0 0.0
    %1668 = vmatpush1.msra.mxu0 0.0
    %1669 = vmatprep.subr.mxu0 0.0
    %1670 = vmatpush1.msra.mxu0 0.0
    %1671 = vmatprep.subr.mxu0 0.0
    %1672 = vmatpush1.msra.mxu0 0.0
    %1673 = vmatprep.subr.mxu0 0.0
    %1674 = vmatpush1.msra.mxu0 0.0
    %1675 = vmatprep.subr.mxu0 0.0
    %1676 = vmatpush1.msra.mxu0 0.0
    %1677 = vmatprep.subr.mxu0 0.0
    %1678 = vmatpush1.msra.mxu0 0.0
    %1679 = vmatprep.subr.mxu0 0.0
    %1680 = vmatpush1.msra.mxu0 0.0
    %1681 = vmatprep.subr.mxu0 0.0
    %1682 = vmatpush1.msra.mxu0 0.0
    %1683 = vmatprep.subr.mxu0 0.0
    %1684 = vmatpush1.msra.mxu0 0.0
    %1685 = vmatprep.subr.mxu0 0.0
    %1686 = vmatpush1.msra.mxu0 0.0
    %1687 = vmatprep.subr.mxu0 0.0
    %1688 = vmatpush1.msra.mxu0 0.0
    %1689 = vmatprep.subr.mxu0 0.0
    %1690 = vmatpush1.msra.mxu0 0.0
    %1691 = vmatprep.subr.mxu0 0.0
    %1692 = vmatpush1.msra.mxu0 0.0
    %1693 = vmatprep.subr.mxu0 0.0
    %1694 = vmatpush1.msra.mxu0 0.0
    %1695 = vmatprep.subr.mxu0 0.0
    %1696 = vmatpush1.msra.mxu0 0.0
    %1697 = vmatprep.subr.mxu0 0.0
    %1698 = vmatpush1.msra.mxu0 0.0
    %1699 = vmatprep.subr.mxu0 0.0
    %1700 = vmatpush1.msra.mxu0 0.0
    %1701 = vmatprep.mubr.f32.mxu0 0.0
    %1702 = vmatmul.mubr.f32.gmra.mrb[0].mxu0 %v1635
    %v1703 = vpop.f32.mrb[0].mxu0
    %v1704 = vadd.f32 0.0, %v1703
    %v1705 = vpop.f32.mrb[0].mxu0
    %1706 = vdwg.mxu0
    %1707 = vrot.lane.b32.xlu0 %v125, 64
    %v1708 = vpop.permute.xlu0 %1707
    %v1711 = vsel %vm152, %v1248, 0
    %1713 = vmatprep.subr.mxu0 0.0
    %1714 = vmatpush1.msra.mxu0 %v1708
    %1715 = vmatprep.subr.mxu0 0.0
    %1716 = vmatpush1.msra.mxu0 0.0
    %1717 = vmatprep.subr.mxu0 0.0
    %1718 = vmatpush1.msra.mxu0 0.0
    %1719 = vmatprep.subr.mxu0 0.0
    %1720 = vmatpush1.msra.mxu0 0.0
    %1721 = vmatprep.subr.mxu0 0.0
    %1722 = vmatpush1.msra.mxu0 0.0
    %1723 = vmatprep.subr.mxu0 0.0
    %1724 = vmatpush1.msra.mxu0 0.0
    %1725 = vmatprep.subr.mxu0 0.0
    %1726 = vmatpush1.msra.mxu0 0.0
    %1727 = vmatprep.subr.mxu0 0.0
    %1728 = vmatpush1.msra.mxu0 0.0
    %1729 = vmatprep.subr.mxu0 0.0
    %1730 = vmatpush1.msra.mxu0 0.0
    %1731 = vmatprep.subr.mxu0 0.0
    %1732 = vmatpush1.msra.mxu0 0.0
    %1733 = vmatprep.subr.mxu0 0.0
    %1734 = vmatpush1.msra.mxu0 0.0
    %1735 = vmatprep.subr.mxu0 0.0
    %1736 = vmatpush1.msra.mxu0 0.0
    %1737 = vmatprep.subr.mxu0 0.0
    %1738 = vmatpush1.msra.mxu0 0.0
    %1739 = vmatprep.subr.mxu0 0.0
    %1740 = vmatpush1.msra.mxu0 0.0
    %1741 = vmatprep.subr.mxu0 0.0
    %1742 = vmatpush1.msra.mxu0 0.0
    %1743 = vmatprep.subr.mxu0 0.0
    %1744 = vmatpush1.msra.mxu0 0.0
    %1745 = vmatprep.subr.mxu0 0.0
    %1746 = vmatpush1.msra.mxu0 0.0
    %1747 = vmatprep.subr.mxu0 0.0
    %1748 = vmatpush1.msra.mxu0 0.0
    %1749 = vmatprep.subr.mxu0 0.0
    %1750 = vmatpush1.msra.mxu0 0.0
    %1751 = vmatprep.subr.mxu0 0.0
    %1752 = vmatpush1.msra.mxu0 0.0
    %1753 = vmatprep.subr.mxu0 0.0
    %1754 = vmatpush1.msra.mxu0 0.0
    %1755 = vmatprep.subr.mxu0 0.0
    %1756 = vmatpush1.msra.mxu0 0.0
    %1757 = vmatprep.subr.mxu0 0.0
    %1758 = vmatpush1.msra.mxu0 0.0
    %1759 = vmatprep.subr.mxu0 0.0
    %1760 = vmatpush1.msra.mxu0 0.0
    %1761 = vmatprep.subr.mxu0 0.0
    %1762 = vmatpush1.msra.mxu0 0.0
    %1763 = vmatprep.subr.mxu0 0.0
    %1764 = vmatpush1.msra.mxu0 0.0
    %1765 = vmatprep.subr.mxu0 0.0
    %1766 = vmatpush1.msra.mxu0 0.0
    %1767 = vmatprep.subr.mxu0 0.0
    %1768 = vmatpush1.msra.mxu0 0.0
    %1769 = vmatprep.subr.mxu0 0.0
    %1770 = vmatpush1.msra.mxu0 0.0
    %1771 = vmatprep.subr.mxu0 0.0
    %1772 = vmatpush1.msra.mxu0 0.0
    %1773 = vmatprep.subr.mxu0 0.0
    %1774 = vmatpush1.msra.mxu0 0.0
    %1775 = vmatprep.subr.mxu0 0.0
    %1776 = vmatpush1.msra.mxu0 0.0
    %1777 = vmatprep.mubr.f32.mxu0 0.0
    %1778 = vmatmul.mubr.f32.gmra.mrb[0].mxu0 %v1711
    %v1779 = vpop.f32.mrb[0].mxu0
    %v1780 = vadd.f32 0.0, %v1779
    %v1781 = vpop.f32.mrb[0].mxu0
    %1782 = vdwg.mxu0
    %1783 = vrot.lane.b32.xlu0 %v127, 64
    %v1784 = vpop.permute.xlu0 %1783
    %v1787 = vsel %vm152, %v1250, 0
    %1789 = vmatprep.subr.mxu0 0.0
    %1790 = vmatpush1.msra.mxu0 %v1784
    %1791 = vmatprep.subr.mxu0 0.0
    %1792 = vmatpush1.msra.mxu0 0.0
    %1793 = vmatprep.subr.mxu0 0.0
    %1794 = vmatpush1.msra.mxu0 0.0
    %1795 = vmatprep.subr.mxu0 0.0
    %1796 = vmatpush1.msra.mxu0 0.0
    %1797 = vmatprep.subr.mxu0 0.0
    %1798 = vmatpush1.msra.mxu0 0.0
    %1799 = vmatprep.subr.mxu0 0.0
    %1800 = vmatpush1.msra.mxu0 0.0
    %1801 = vmatprep.subr.mxu0 0.0
    %1802 = vmatpush1.msra.mxu0 0.0
    %1803 = vmatprep.subr.mxu0 0.0
    %1804 = vmatpush1.msra.mxu0 0.0
    %1805 = vmatprep.subr.mxu0 0.0
    %1806 = vmatpush1.msra.mxu0 0.0
    %1807 = vmatprep.subr.mxu0 0.0
    %1808 = vmatpush1.msra.mxu0 0.0
    %1809 = vmatprep.subr.mxu0 0.0
    %1810 = vmatpush1.msra.mxu0 0.0
    %1811 = vmatprep.subr.mxu0 0.0
    %1812 = vmatpush1.msra.mxu0 0.0
    %1813 = vmatprep.subr.mxu0 0.0
    %1814 = vmatpush1.msra.mxu0 0.0
    %1815 = vmatprep.subr.mxu0 0.0
    %1816 = vmatpush1.msra.mxu0 0.0
    %1817 = vmatprep.subr.mxu0 0.0
    %1818 = vmatpush1.msra.mxu0 0.0
    %1819 = vmatprep.subr.mxu0 0.0
    %1820 = vmatpush1.msra.mxu0 0.0
    %1821 = vmatprep.subr.mxu0 0.0
    %1822 = vmatpush1.msra.mxu0 0.0
    %1823 = vmatprep.subr.mxu0 0.0
    %1824 = vmatpush1.msra.mxu0 0.0
    %1825 = vmatprep.subr.mxu0 0.0
    %1826 = vmatpush1.msra.mxu0 0.0
    %1827 = vmatprep.subr.mxu0 0.0
    %1828 = vmatpush1.msra.mxu0 0.0
    %1829 = vmatprep.subr.mxu0 0.0
    %1830 = vmatpush1.msra.mxu0 0.0
    %1831 = vmatprep.subr.mxu0 0.0
    %1832 = vmatpush1.msra.mxu0 0.0
    %1833 = vmatprep.subr.mxu0 0.0
    %1834 = vmatpush1.msra.mxu0 0.0
    %1835 = vmatprep.subr.mxu0 0.0
    %1836 = vmatpush1.msra.mxu0 0.0
    %1837 = vmatprep.subr.mxu0 0.0
    %1838 = vmatpush1.msra.mxu0 0.0
    %1839 = vmatprep.subr.mxu0 0.0
    %1840 = vmatpush1.msra.mxu0 0.0
    %1841 = vmatprep.subr.mxu0 0.0
    %1842 = vmatpush1.msra.mxu0 0.0
    %1843 = vmatprep.subr.mxu0 0.0
    %1844 = vmatpush1.msra.mxu0 0.0
    %1845 = vmatprep.subr.mxu0 0.0
    %1846 = vmatpush1.msra.mxu0 0.0
    %1847 = vmatprep.subr.mxu0 0.0
    %1848 = vmatpush1.msra.mxu0 0.0
    %1849 = vmatprep.subr.mxu0 0.0
    %1850 = vmatpush1.msra.mxu0 0.0
    %1851 = vmatprep.subr.mxu0 0.0
    %1852 = vmatpush1.msra.mxu0 0.0
    %1853 = vmatprep.mubr.f32.mxu0 0.0
    %1854 = vmatmul.mubr.f32.gmra.mrb[0].mxu0 %v1787
    %v1855 = vpop.f32.mrb[0].mxu0
    %v1856 = vadd.f32 0.0, %v1855
    %v1857 = vpop.f32.mrb[0].mxu0
    %1858 = vdwg.mxu0
    %1861 = vrot.lane.b32.xlu0 %v1476, 8
    %v1862 = vpop.permute.xlu0 %1861
    %1863 = vrot.lane.b32.xlu0 %v1552, 8
    %v1864 = vpop.permute.xlu0 %1863
    %1869 = vrot.lane.b32.xlu0 %v1628, 16
    %v1870 = vpop.permute.xlu0 %1869
    %1871 = vrot.lane.b32.xlu0 %v1704, 16
    %v1872 = vpop.permute.xlu0 %1871
    %1877 = vrot.lane.b32.xlu0 %v1780, 24
    %v1878 = vpop.permute.xlu0 %1877
    %1879 = vrot.lane.b32.xlu0 %v1856, 24
    %v1880 = vpop.permute.xlu0 %1879
    %v1883 = vsel %vm152, %v1324, %v1862
    %v1884 = vsel %vm152, %v1400, %v1864
    %vm1885 = vcmask 130048
    %v1886 = vsel %vm1885, %v1883, %v1870
    %v1887 = vsel %vm1885, %v1884, %v1872
    %vm1888 = vcmask 195584
    %v1889 = vsel %vm1888, %v1886, %v1878
    %v1890 = vsel %vm1888, %v1887, %v1880
    %v1891 = vld [vmem:[%s2] sm:$0xff]
    %v1892 = vld [vmem:[%s2 + $0x8] sm:$0xff]
    %v1893 = vld [vmem:[%s2 + $0x10] sm:$0xff]
    %v1894 = vld [vmem:[%s2 + $0x18] sm:$0xff]
    %v1895 = vlaneseq
    %v1896 = vshrl.u32 %v1895, 7
    %v1897 = vsub.s32 1, %v1896
    %v1898 = vrot.slane %v23, %v1897
    %v1900 = vsel %vm32, %v1889, 0
    %v1903 = vsel %vm32, %v1890, 0
    %1905 = vmatprep.subr.mxu0 0.0
    %1906 = vmatpush1.msra.mxu0 %v1891
    %1907 = vmatprep.subr.mxu0 0.0
    %1908 = vmatpush1.msra.mxu0 %v1892
    %1909 = vmatprep.subr.mxu0 0.0
    %1910 = vmatpush1.msra.mxu0 %v1893
    %1911 = vmatprep.subr.mxu0 0.0
    %1912 = vmatpush1.msra.mxu0 %v1894
    %1913 = vmatprep.subr.mxu0 0.0
    %1914 = vmatpush1.msra.mxu0 0.0
    %1915 = vmatprep.subr.mxu0 0.0
    %1916 = vmatpush1.msra.mxu0 0.0
    %1917 = vmatprep.subr.mxu0 0.0
    %1918 = vmatpush1.msra.mxu0 0.0
    %1919 = vmatprep.subr.mxu0 0.0
    %1920 = vmatpush1.msra.mxu0 0.0
    %1921 = vmatprep.subr.mxu0 0.0
    %1922 = vmatpush1.msra.mxu0 0.0
    %1923 = vmatprep.subr.mxu0 0.0
    %1924 = vmatpush1.msra.mxu0 0.0
    %1925 = vmatprep.subr.mxu0 0.0
    %1926 = vmatpush1.msra.mxu0 0.0
    %1927 = vmatprep.subr.mxu0 0.0
    %1928 = vmatpush1.msra.mxu0 0.0
    %1929 = vmatprep.subr.mxu0 0.0
    %1930 = vmatpush1.msra.mxu0 0.0
    %1931 = vmatprep.subr.mxu0 0.0
    %1932 = vmatpush1.msra.mxu0 0.0
    %1933 = vmatprep.subr.mxu0 0.0
    %1934 = vmatpush1.msra.mxu0 0.0
    %1935 = vmatprep.subr.mxu0 0.0
    %1936 = vmatpush1.msra.mxu0 0.0
    %1937 = vmatprep.subr.mxu0 0.0
    %1938 = vmatpush1.msra.mxu0 0.0
    %1939 = vmatprep.subr.mxu0 0.0
    %1940 = vmatpush1.msra.mxu0 0.0
    %1941 = vmatprep.subr.mxu0 0.0
    %1942 = vmatpush1.msra.mxu0 0.0
    %1943 = vmatprep.subr.mxu0 0.0
    %1944 = vmatpush1.msra.mxu0 0.0
    %1945 = vmatprep.subr.mxu0 0.0
    %1946 = vmatpush1.msra.mxu0 0.0
    %1947 = vmatprep.subr.mxu0 0.0
    %1948 = vmatpush1.msra.mxu0 0.0
    %1949 = vmatprep.subr.mxu0 0.0
    %1950 = vmatpush1.msra.mxu0 0.0
    %1951 = vmatprep.subr.mxu0 0.0
    %1952 = vmatpush1.msra.mxu0 0.0
    %1953 = vmatprep.subr.mxu0 0.0
    %1954 = vmatpush1.msra.mxu0 0.0
    %1955 = vmatprep.subr.mxu0 0.0
    %1956 = vmatpush1.msra.mxu0 0.0
    %1957 = vmatprep.subr.mxu0 0.0
    %1958 = vmatpush1.msra.mxu0 0.0
    %1959 = vmatprep.subr.mxu0 0.0
    %1960 = vmatpush1.msra.mxu0 0.0
    %1961 = vmatprep.subr.mxu0 0.0
    %1962 = vmatpush1.msra.mxu0 0.0
    %1963 = vmatprep.subr.mxu0 0.0
    %1964 = vmatpush1.msra.mxu0 0.0
    %1965 = vmatprep.subr.mxu0 0.0
    %1966 = vmatpush1.msra.mxu0 0.0
    %1967 = vmatprep.subr.mxu0 0.0
    %1968 = vmatpush1.msra.mxu0 0.0
    %1969 = vmatprep.mubr.f32.mxu0 0.0
    %1970 = vmatmul.mubr.f32.gmra.mrb[0].mxu0 %v1900
    %v1971 = vpop.f32.mrb[0].mxu0
    %v1972 = vadd.f32 %v1898, %v1971
    %v1973 = vpop.f32.mrb[0].mxu0
    %1974 = vmatprep.mubr.f32.mxu0 0.0
    %1975 = vmatmul.mubr.f32.gmra.mrb[0].mxu0 %v1903
    %v1976 = vpop.f32.mrb[0].mxu0
    %v1977 = vadd.f32 %v1898, %v1976
    %v1978 = vpop.f32.mrb[0].mxu0
    %1979 = vdwg.mxu0
    %v1980 = vadd.f32 %v1972, %v21
    %v1981 = vadd.f32 %v1977, %v22
    %v1982 = vsel %vm32, %v1980, 0.0
    %1983 = vadd.xlane.f32.xlu0 %v1982
    %v1984 = vpop.xlane.xlu0 %1983
    %v1985 = vsel %vm32, %v1981, 0.0
    %1986 = vadd.xlane.f32.xlu0 %v1985
    %v1987 = vpop.xlane.xlu0 %1986
    %v1988 = vrcp.pop 32.0
    %v1989 = vmul.f32 %v1984, %v1988
    %v1990 = vmul.f32 %v1987, %v1988
    %v1991 = vsub.f32 %v1980, %v1989
    %v1992 = vsub.f32 %v1981, %v1990
    %v1993 = vmul.f32 %v1991, %v1991
    %v1994 = vmul.f32 %v1992, %v1992
    %v1995 = vsel %vm32, %v1993, 0.0
    %1996 = vadd.xlane.f32.xlu0 %v1995
    %v1997 = vpop.xlane.xlu0 %1996
    %v1998 = vsel %vm32, %v1994, 0.0
    %1999 = vadd.xlane.f32.xlu0 %v1998
    %v2000 = vpop.xlane.xlu0 %1999
    %v2001 = vmul.f32 %v1997, %v1988
    %v2002 = vmul.f32 %v2000, %v1988
    %v2003 = vadd.f32 %v2001, 1e-06
    %v2004 = vadd.f32 %v2002, 1e-06
    %v2005 = vrsqrt.pop %v2003
    %v2006 = vrsqrt.pop %v2004
    %v2007 = vmul.f32 %v1991, %v2005
    %v2008 = vmul.f32 %v1992, %v2006
    %v2009 = vlaneseq
    %v2010 = vshrl.u32 %v2009, 7
    %v2011 = vsub.s32 2, %v2010
    %v2012 = vrot.slane %v23, %v2011
    %v2013 = vmul.f32 %v2007, %v2012
    %v2014 = vmul.f32 %v2008, %v2012
    %v2015 = vlaneseq
    %v2016 = vshrl.u32 %v2015, 7
    %v2017 = vsub.s32 3, %v2016
    %v2018 = vrot.slane %v23, %v2017
    %v2019 = vadd.f32 %v2013, %v2018
    %v2020 = vadd.f32 %v2014, %v2018
    %v2021 = vlaneseq
    %v2022 = vshrl.u32 %v2021, 7
    %v2023 = vsub.s32 4, %v2022
    %v2024 = vrot.slane %v23, %v2023
    %2029 = vrot.lane.b32.xlu0 %v1891, 96
    %v2030 = vpop.permute.xlu0 %2029
    %2031 = vrot.lane.b32.xlu0 %v1892, 96
    %v2032 = vpop.permute.xlu0 %2031
    %2033 = vrot.lane.b32.xlu0 %v1893, 96
    %v2034 = vpop.permute.xlu0 %2033
    %2035 = vrot.lane.b32.xlu0 %v1894, 96
    %v2036 = vpop.permute.xlu0 %2035
    %v2042 = vsel %vm32, %v2019, 0
    %v2045 = vsel %vm32, %v2020, 0
    %2047 = vmatprep.subr.mxu0 0.0
    %2048 = vmatpush1.msra.mxu0 %v2030
    %2049 = vmatprep.subr.mxu0 0.0
    %2050 = vmatpush1.msra.mxu0 %v2032
    %2051 = vmatprep.subr.mxu0 0.0
    %2052 = vmatpush1.msra.mxu0 %v2034
    %2053 = vmatprep.subr.mxu0 0.0
    %2054 = vmatpush1.msra.mxu0 %v2036
    %2055 = vmatprep.subr.mxu0 0.0
    %2056 = vmatpush1.msra.mxu0 0.0
    %2057 = vmatprep.subr.mxu0 0.0
    %2058 = vmatpush1.msra.mxu0 0.0
    %2059 = vmatprep.subr.mxu0 0.0
    %2060 = vmatpush1.msra.mxu0 0.0
    %2061 = vmatprep.subr.mxu0 0.0
    %2062 = vmatpush1.msra.mxu0 0.0
    %2063 = vmatprep.subr.mxu0 0.0
    %2064 = vmatpush1.msra.mxu0 0.0
    %2065 = vmatprep.subr.mxu0 0.0
    %2066 = vmatpush1.msra.mxu0 0.0
    %2067 = vmatprep.subr.mxu0 0.0
    %2068 = vmatpush1.msra.mxu0 0.0
    %2069 = vmatprep.subr.mxu0 0.0
    %2070 = vmatpush1.msra.mxu0 0.0
    %2071 = vmatprep.subr.mxu0 0.0
    %2072 = vmatpush1.msra.mxu0 0.0
    %2073 = vmatprep.subr.mxu0 0.0
    %2074 = vmatpush1.msra.mxu0 0.0
    %2075 = vmatprep.subr.mxu0 0.0
    %2076 = vmatpush1.msra.mxu0 0.0
    %2077 = vmatprep.subr.mxu0 0.0
    %2078 = vmatpush1.msra.mxu0 0.0
    %2079 = vmatprep.subr.mxu0 0.0
    %2080 = vmatpush1.msra.mxu0 0.0
    %2081 = vmatprep.subr.mxu0 0.0
    %2082 = vmatpush1.msra.mxu0 0.0
    %2083 = vmatprep.subr.mxu0 0.0
    %2084 = vmatpush1.msra.mxu0 0.0
    %2085 = vmatprep.subr.mxu0 0.0
    %2086 = vmatpush1.msra.mxu0 0.0
    %2087 = vmatprep.subr.mxu0 0.0
    %2088 = vmatpush1.msra.mxu0 0.0
    %2089 = vmatprep.subr.mxu0 0.0
    %2090 = vmatpush1.msra.mxu0 0.0
    %2091 = vmatprep.subr.mxu0 0.0
    %2092 = vmatpush1.msra.mxu0 0.0
    %2093 = vmatprep.subr.mxu0 0.0
    %2094 = vmatpush1.msra.mxu0 0.0
    %2095 = vmatprep.subr.mxu0 0.0
    %2096 = vmatpush1.msra.mxu0 0.0
    %2097 = vmatprep.subr.mxu0 0.0
    %2098 = vmatpush1.msra.mxu0 0.0
    %2099 = vmatprep.subr.mxu0 0.0
    %2100 = vmatpush1.msra.mxu0 0.0
    %2101 = vmatprep.subr.mxu0 0.0
    %2102 = vmatpush1.msra.mxu0 0.0
    %2103 = vmatprep.subr.mxu0 0.0
    %2104 = vmatpush1.msra.mxu0 0.0
    %2105 = vmatprep.subr.mxu0 0.0
    %2106 = vmatpush1.msra.mxu0 0.0
    %2107 = vmatprep.subr.mxu0 0.0
    %2108 = vmatpush1.msra.mxu0 0.0
    %2109 = vmatprep.subr.mxu0 0.0
    %2110 = vmatpush1.msra.mxu0 0.0
    %2111 = vmatprep.mubr.f32.mxu0 0.0
    %2112 = vmatmul.mubr.f32.gmra.mrb[0].mxu0 %v2042
    %v2113 = vpop.f32.mrb[0].mxu0
    %v2114 = vadd.f32 %v2024, %v2113
    %v2115 = vpop.f32.mrb[0].mxu0
    %2116 = vmatprep.mubr.f32.mxu0 0.0
    %2117 = vmatmul.mubr.f32.gmra.mrb[0].mxu0 %v2045
    %v2118 = vpop.f32.mrb[0].mxu0
    %v2119 = vadd.f32 %v2024, %v2118
    %v2120 = vpop.f32.mrb[0].mxu0
    %2121 = vdwg.mxu0
    %v2122 = vmax.f32 %v2114, 0.0
    %v2123 = vmax.f32 %v2119, 0.0
    %v2124 = vld [vmem:[%s3] sm:$0xff]
    %v2125 = vld [vmem:[%s3 + $0x8] sm:$0xff]
    %v2126 = vld [vmem:[%s3 + $0x10] sm:$0xff]
    %v2127 = vld [vmem:[%s3 + $0x18] sm:$0xff]
    %v2128 = vld [vmem:[%s3 + $0x20] sm:$0xff]
    %v2129 = vld [vmem:[%s3 + $0x28] sm:$0xff]
    %v2130 = vld [vmem:[%s3 + $0x30] sm:$0xff]
    %v2131 = vld [vmem:[%s3 + $0x38] sm:$0xff]
    %v2132 = vlaneseq
    %v2133 = vshrl.u32 %v2132, 7
    %v2134 = vsub.s32 5, %v2133
    %v2135 = vrot.slane %v23, %v2134
    %vm2136 = vcmask 523264
    %v2138 = vsel %vm2136, %v2122, 0
    %v2141 = vsel %vm2136, %v2123, 0
    %2143 = vmatprep.subr.mxu0 0.0
    %2144 = vmatpush1.msra.mxu0 %v2124
    %2145 = vmatprep.subr.mxu0 0.0
    %2146 = vmatpush1.msra.mxu0 %v2125
    %2147 = vmatprep.subr.mxu0 0.0
    %2148 = vmatpush1.msra.mxu0 %v2126
    %2149 = vmatprep.subr.mxu0 0.0
    %2150 = vmatpush1.msra.mxu0 %v2127
    %2151 = vmatprep.subr.mxu0 0.0
    %2152 = vmatpush1.msra.mxu0 %v2128
    %2153 = vmatprep.subr.mxu0 0.0
    %2154 = vmatpush1.msra.mxu0 %v2129
    %2155 = vmatprep.subr.mxu0 0.0
    %2156 = vmatpush1.msra.mxu0 %v2130
    %2157 = vmatprep.subr.mxu0 0.0
    %2158 = vmatpush1.msra.mxu0 %v2131
    %2159 = vmatprep.subr.mxu0 0.0
    %2160 = vmatpush1.msra.mxu0 0.0
    %2161 = vmatprep.subr.mxu0 0.0
    %2162 = vmatpush1.msra.mxu0 0.0
    %2163 = vmatprep.subr.mxu0 0.0
    %2164 = vmatpush1.msra.mxu0 0.0
    %2165 = vmatprep.subr.mxu0 0.0
    %2166 = vmatpush1.msra.mxu0 0.0
    %2167 = vmatprep.subr.mxu0 0.0
    %2168 = vmatpush1.msra.mxu0 0.0
    %2169 = vmatprep.subr.mxu0 0.0
    %2170 = vmatpush1.msra.mxu0 0.0
    %2171 = vmatprep.subr.mxu0 0.0
    %2172 = vmatpush1.msra.mxu0 0.0
    %2173 = vmatprep.subr.mxu0 0.0
    %2174 = vmatpush1.msra.mxu0 0.0
    %2175 = vmatprep.subr.mxu0 0.0
    %2176 = vmatpush1.msra.mxu0 0.0
    %2177 = vmatprep.subr.mxu0 0.0
    %2178 = vmatpush1.msra.mxu0 0.0
    %2179 = vmatprep.subr.mxu0 0.0
    %2180 = vmatpush1.msra.mxu0 0.0
    %2181 = vmatprep.subr.mxu0 0.0
    %2182 = vmatpush1.msra.mxu0 0.0
    %2183 = vmatprep.subr.mxu0 0.0
    %2184 = vmatpush1.msra.mxu0 0.0
    %2185 = vmatprep.subr.mxu0 0.0
    %2186 = vmatpush1.msra.mxu0 0.0
    %2187 = vmatprep.subr.mxu0 0.0
    %2188 = vmatpush1.msra.mxu0 0.0
    %2189 = vmatprep.subr.mxu0 0.0
    %2190 = vmatpush1.msra.mxu0 0.0
    %2191 = vmatprep.subr.mxu0 0.0
    %2192 = vmatpush1.msra.mxu0 0.0
    %2193 = vmatprep.subr.mxu0 0.0
    %2194 = vmatpush1.msra.mxu0 0.0
    %2195 = vmatprep.subr.mxu0 0.0
    %2196 = vmatpush1.msra.mxu0 0.0
    %2197 = vmatprep.subr.mxu0 0.0
    %2198 = vmatpush1.msra.mxu0 0.0
    %2199 = vmatprep.subr.mxu0 0.0
    %2200 = vmatpush1.msra.mxu0 0.0
    %2201 = vmatprep.subr.mxu0 0.0
    %2202 = vmatpush1.msra.mxu0 0.0
    %2203 = vmatprep.subr.mxu0 0.0
    %2204 = vmatpush1.msra.mxu0 0.0
    %2205 = vmatprep.subr.mxu0 0.0
    %2206 = vmatpush1.msra.mxu0 0.0
    %2207 = vmatprep.mubr.f32.mxu0 0.0
    %2208 = vmatmul.mubr.f32.gmra.mrb[0].mxu0 %v2138
    %v2209 = vpop.f32.mrb[0].mxu0
    %v2210 = vadd.f32 %v2135, %v2209
    %v2211 = vpop.f32.mrb[0].mxu0
    %2212 = vmatprep.mubr.f32.mxu0 0.0
    %2213 = vmatmul.mubr.f32.gmra.mrb[0].mxu0 %v2141
    %v2214 = vpop.f32.mrb[0].mxu0
    %v2215 = vadd.f32 %v2135, %v2214
    %v2216 = vpop.f32.mrb[0].mxu0
    %2217 = vdwg.mxu0
    %v2218 = vadd.f32 %v2019, %v2210
    %v2219 = vadd.f32 %v2020, %v2215
    %v2220 = vsel %vm32, %v2218, 0.0
    %2221 = vadd.xlane.f32.xlu0 %v2220
    %v2222 = vpop.xlane.xlu0 %2221
    %v2223 = vsel %vm32, %v2219, 0.0
    %2224 = vadd.xlane.f32.xlu0 %v2223
    %v2225 = vpop.xlane.xlu0 %2224
    %v2226 = vmul.f32 %v2222, %v1988
    %v2227 = vmul.f32 %v2225, %v1988
    %v2228 = vsub.f32 %v2218, %v2226
    %v2229 = vsub.f32 %v2219, %v2227
    %v2230 = vmul.f32 %v2228, %v2228
    %v2231 = vmul.f32 %v2229, %v2229
    %v2232 = vsel %vm32, %v2230, 0.0
    %2233 = vadd.xlane.f32.xlu0 %v2232
    %v2234 = vpop.xlane.xlu0 %2233
    %v2235 = vsel %vm32, %v2231, 0.0
    %2236 = vadd.xlane.f32.xlu0 %v2235
    %v2237 = vpop.xlane.xlu0 %2236
    %v2238 = vmul.f32 %v2234, %v1988
    %v2239 = vmul.f32 %v2237, %v1988
    %v2240 = vadd.f32 %v2238, 1e-06
    %v2241 = vadd.f32 %v2239, 1e-06
    %v2242 = vrsqrt.pop %v2240
    %v2243 = vrsqrt.pop %v2241
    %v2244 = vmul.f32 %v2228, %v2242
    %v2245 = vmul.f32 %v2229, %v2243
    %v2246 = vlaneseq
    %v2247 = vshrl.u32 %v2246, 7
    %v2248 = vsub.s32 6, %v2247
    %v2249 = vrot.slane %v23, %v2248
    %v2250 = vmul.f32 %v2244, %v2249
    %v2251 = vmul.f32 %v2245, %v2249
    %v2252 = vlaneseq
    %v2253 = vshrl.u32 %v2252, 7
    %v2254 = vsub.s32 7, %v2253
    %v2255 = vrot.slane %v23, %v2254
    %v2256 = vadd.f32 %v2250, %v2255
    %v2257 = vadd.f32 %v2251, %v2255
    %2258 = vst.msk [vmem:[#allocation2] sm:$0xff] %vm32, %v2256
    %2259 = vst.msk [vmem:[#allocation2 + $0x8] sm:$0xff] %vm32, %v2257
    // Predicated region
    $region22: #{tpu_custom_call.1} parent=1 // pred_check
      _
    $region23: #{tpu_custom_call.1} parent=1 // pred_check_branch
      %2261 = sbr.rel (0) target = $region25
    $region24: #{tpu_custom_call.1} parent=1 // pred_region
      %s2263 = ssub.s32 256, 256
      %2264 = vsyncadd [#allocation3], %s2263
      %s2265 = sshll.u32 [#allocation2], 4
      %s2266 = int_to_ptr.vmem [resolvable:$true] %s2265
      %2271 = dma.vmem_to_hbm [thread:$0]  %s2266, 256, %s5, [#allocation3], 128, 128, 8
    $region25: #{tpu_custom_call.1} parent=1 // pred_fallthru
      _
    // Predicated region
    $region26: #{tpu_custom_call.1} parent=1 // pred_check
      _
    $region27: #{tpu_custom_call.1} parent=1 // pred_check_branch
      %2273 = sbr.rel (0) target = $region29
    $region28: #{tpu_custom_call.1} parent=1 // pred_region
      %2274 = dma.done [#allocation3], 256
    $region29: #{tpu_custom_call.1} parent=1 // pred_fallthru
      _
    %2275 = vsyncpa [#allocation3], 1

</llo_original>
